<compile_context>
chip_gen: v6e
topology: v6e:2x2x1
jax: 0.10.0
libtpu: 0.0.40
codegen_flags: <defaults>
</compile_context>

<pallas_src>
import numpy as np
import jax
import jax.numpy as jnp
from jax.experimental import pallas as pl
from jax.experimental.pallas import tpu as pltpu


def _pcvf_kernel(
    p1_ref, p2_ref,                      # (tile_b, tile_p) policy-parameter tiles (orig dtype)
    ew0_ref, eb0_ref, ew1_ref, eb1_ref,  # embedding net [P -> H_e -> E]
    vw0a_ref, vw0b_ref, vb0_ref,         # eval layer 0, weight pre-split at row E (hstack split)
    vw1_ref, vb1_ref,                    # eval layer 1
    vw2t_ref, vb2_ref,                   # eval layer 2: vw2 transposed to (1, H2), bias (1, 1)
    out_ref,                             # (1, tile_b) f32, lane-dense
    acc1_ref, acc2_ref,                  # (tile_b, H_e) f32 accumulators (per policy)
):
    k = pl.program_id(1)
    cdt = ew1_ref.dtype                  # MXU operand dtype (bf16)
    tb, tp = p1_ref.shape

    @pl.when(k == 0)
    def _():
        acc1_ref[...] = jnp.zeros_like(acc1_ref)
        acc2_ref[...] = jnp.zeros_like(acc2_ref)

    # Resident ew0 (const index_map) is sliced in-kernel to the current K window;
    # a K-tiled ew0 already arrives as (tile_p, H_e).
    if ew0_ref.shape[0] == tp:
        w0 = ew0_ref[...]
    else:
        off = pl.multiple_of(k * tp, tp)
        w0 = ew0_ref[pl.ds(off, tp), :]

    # Two direct accumulator updates — no per-step concatenate copy.
    # Inputs cast to bf16 per tile here (in-VMEM), accumulation stays f32.
    acc1_ref[...] += jnp.dot(p1_ref[...].astype(cdt), w0,
                             preferred_element_type=jnp.float32)
    acc2_ref[...] += jnp.dot(p2_ref[...].astype(cdt), w0,
                             preferred_element_type=jnp.float32)

    @pl.when(k == pl.num_programs(1) - 1)
    def _():
        def embed(acc):
            # Embedding net: ReLU hidden, linear output (flatten is a no-op on 2-D).
            hh = jnp.maximum(acc + eb0_ref[...], 0.0)                     # f32
            ee = jnp.dot(hh.astype(cdt), ew1_ref[...],
                         preferred_element_type=jnp.float32) + eb1_ref[...]
            return ee.astype(cdt)                                         # (tb, E)

        e1 = embed(acc1_ref[...])
        e2 = embed(acc2_ref[...])

        # hstack([e1, e2]) @ vw0 == e1 @ vw0[:E] + e2 @ vw0[E:]   (exact split).
        h = (jnp.dot(e1, vw0a_ref[...], preferred_element_type=jnp.float32)
             + jnp.dot(e2, vw0b_ref[...], preferred_element_type=jnp.float32)
             + vb0_ref[...])
        h = jnp.maximum(h, 0.0)

        h = jnp.dot(h.astype(cdt), vw1_ref[...],
                    preferred_element_type=jnp.float32) + vb1_ref[...]
        h = jnp.maximum(h, 0.0)                                           # (tb, H2) f32

        # Final H2 -> 1 projection on the VPU/XLU (no N=1 MXU matmul), emitted
        # directly in the lane-dense (1, tile_b) orientation. Linear (no final act).
        out_row = jnp.sum(h * vw2t_ref[...], axis=-1)[None, :] + vb2_ref[...]
        out_ref[...] = out_row.astype(out_ref.dtype)


def _pick_batch_tile(B):
    for c in (256, 128):
        if B % c == 0:
            return c
    return B           # single batch tile (keeps the lane-dense out block legal)


def _pick_param_tile(P, tile_b, in_bytes, buffers, budget_bytes):
    for c in (2048, 1024, 512, 256, 128):
        if P % c == 0 and 2 * buffers * tile_b * c * in_bytes <= budget_bytes:
            return c
    return P


def comparing_start_state_pcvf_forward(
    mlp_parameters_1, mlp_parameters_2, params, *,
    tile_b=None, tile_p=None, compute_dtype=jnp.bfloat16,
    input_buffers=3, ew0_resident_max_bytes=8 * 1024 * 1024,
):
    """Fused Pallas forward.  Inputs: (B, P) each.  Output: (B, 1) float32."""
    B, P = mlp_parameters_1.shape
    assert mlp_parameters_2.shape == (B, P)
    H_e = params["ew0"].shape[1]
    E = params["ew1"].shape[1]
    H1 = params["vw0"].shape[1]
    H2 = params["vw1"].shape[1]
    assert params["vw0"].shape[0] == 2 * E
    assert params["vw2"].shape == (H2, 1)

    in_bytes = np.dtype(mlp_parameters_1.dtype).itemsize
    wt_bytes = np.dtype(compute_dtype).itemsize

    if tile_b is None:
        tile_b = _pick_batch_tile(B)
    if tile_p is None:
        tile_p = _pick_param_tile(P, tile_b, in_bytes, input_buffers,
                                  40 * 1024 * 1024)
    assert B % tile_b == 0 and P % tile_p == 0, "tiles must evenly divide (B, P)"
    # Lane-dense (1, tile_b) output block requires tile_b % 128 == 0 unless single tile.
    assert tile_b % 128 == 0 or tile_b == B

    # Keep ew0 fully VMEM-resident (DMA'd once, reused across all batch tiles)
    # when it fits a conservative budget; otherwise K-tile it.
    ew0_resident = (P > tile_p) and (P * H_e * wt_bytes <= ew0_resident_max_bytes)

    cw = lambda a: jnp.asarray(a, compute_dtype)   # small weights -> bf16 MXU operands
    cf = lambda a: jnp.asarray(a, jnp.float32)     # biases stay f32
    inputs = (
        mlp_parameters_1, mlp_parameters_2,        # NOT pre-cast; kernel casts per tile
        cw(params["ew0"]), cf(params["eb0"]), cw(params["ew1"]), cf(params["eb1"]),
        cw(params["vw0"][:E]), cw(params["vw0"][E:]), cf(params["vb0"]),
        cw(params["vw1"]), cf(params["vb1"]),
        cf(params["vw2"]).reshape(1, H2), cf(params["vb2"]),
    )

    # VMEM footprint estimate; cap the scoped limit at 48 MiB so the same
    # configuration also fits v7x's 64 MiB VMEM.
    est = (2 * input_buffers * tile_b * tile_p * in_bytes
           + (P * H_e * wt_bytes if ew0_resident else 2 * tile_p * H_e * wt_bytes)
           + 2 * tile_b * H_e * 4
           + 2 * (H_e * E + 2 * E * H1 + H1 * H2) * wt_bytes
           + 2 * (H_e + E + H1 + 2 * H2 + 1) * 4
           + 2 * tile_b * 4)
    vmem_limit = int(min(48 * 1024 * 1024, max(32 * 1024 * 1024, 2 * est)))

    const = lambda i, k: (0, 0)   # weights/biases stay VMEM-resident across the grid

    def build(buffered):
        if buffered:
            p_spec = pl.BlockSpec((tile_b, tile_p), lambda i, k: (i, k),
                                  pipeline_mode=pl.Buffered(input_buffers))
        else:
            p_spec = pl.BlockSpec((tile_b, tile_p), lambda i, k: (i, k))
        ew0_spec = (pl.BlockSpec((P, H_e), const) if ew0_resident
                    else pl.BlockSpec((tile_p, H_e), lambda i, k: (k, 0)))
        in_specs = [
            p_spec, p_spec, ew0_spec,
            pl.BlockSpec((1, H_e), const),     # eb0
            pl.BlockSpec((H_e, E), const),     # ew1
            pl.BlockSpec((1, E), const),       # eb1
            pl.BlockSpec((E, H1), const),      # vw0 top half
            pl.BlockSpec((E, H1), const),      # vw0 bottom half
            pl.BlockSpec((1, H1), const),      # vb0
            pl.BlockSpec((H1, H2), const),     # vw1
            pl.BlockSpec((1, H2), const),      # vb1
            pl.BlockSpec((1, H2), const),      # vw2 (transposed row)
            pl.BlockSpec((1, 1), const),       # vb2
        ]
        out_specs = pl.BlockSpec((1, tile_b), lambda i, k: (0, i))
        return pl.pallas_call(
            _pcvf_kernel,
            out_shape=jax.ShapeDtypeStruct((1, B), jnp.float32),
            grid_spec=pltpu.PrefetchScalarGridSpec(
                num_scalar_prefetch=0,
                grid=(B // tile_b, P // tile_p),
                in_specs=in_specs,
                out_specs=out_specs,
                scratch_shapes=[pltpu.VMEM((tile_b, H_e), jnp.float32),
                                pltpu.VMEM((tile_b, H_e), jnp.float32)],
            ),
            compiler_params=pltpu.CompilerParams(
                dimension_semantics=("parallel", "arbitrary"),
                vmem_limit_bytes=vmem_limit,
            ),
        )

    try:
        out2d = build(input_buffers > 2)(*inputs)
    except Exception:
        # Fallback to default double-buffering if Buffered(n) is not accepted.
        out2d = build(False)(*inputs)

    return out2d.reshape(B, 1)


def init_params(key, p_dim, emb_hidden, emb_size, eval_hidden_dims):
    """Deterministic synthetic weights. Weights stored (in, out); biases (1, out)."""
    dims_embed = [p_dim, emb_hidden, emb_size]
    dims_eval = [emb_size * 2, *eval_hidden_dims, 1]

    def linear(key, din, dout):
        kw, kb = jax.random.split(key)
        scale = 1.0 / jnp.sqrt(jnp.float32(din))
        w = jax.random.uniform(kw, (din, dout), jnp.float32, -scale, scale)
        b = jax.random.uniform(kb, (1, dout), jnp.float32, -scale, scale)
        return w, b

    keys = jax.random.split(key, 5)
    params = {}
    params["ew0"], params["eb0"] = linear(keys[0], dims_embed[0], dims_embed[1])
    params["ew1"], params["eb1"] = linear(keys[1], dims_embed[1], dims_embed[2])
    params["vw0"], params["vb0"] = linear(keys[2], dims_eval[0], dims_eval[1])
    params["vw1"], params["vb1"] = linear(keys[3], dims_eval[1], dims_eval[2])
    params["vw2"], params["vb2"] = linear(keys[4], dims_eval[2], dims_eval[3])
    return params


def reference_forward(p1, p2, params, compute_dtype=jnp.float32):
    """Pure-JAX reference of the module math. compute_dtype mirrors the kernel's
    matmul-operand precision (pass bfloat16 for a near-bit-faithful comparison)."""
    cdt = compute_dtype
    dot = lambda a, b: jnp.dot(a.astype(cdt), b.astype(cdt),
                               preferred_element_type=jnp.float32)

    def embed(x):
        h = jnp.maximum(dot(x, params["ew0"]) + params["eb0"], 0.0)
        return dot(h, params["ew1"]) + params["eb1"]

    e1, e2 = embed(p1), embed(p2)
    cat = jnp.concatenate([e1, e2], axis=1)          # torch.hstack
    h = jnp.maximum(dot(cat, params["vw0"]) + params["vb0"], 0.0)
    h = jnp.maximum(dot(h, params["vw1"]) + params["vb1"], 0.0)
    return dot(h, params["vw2"]) + params["vb2"]


if __name__ == "__main__":
    # mlp_parameters_i are (B, P) flattened policy-MLP parameter vectors.
    # Shapes chosen so the grid has 2 batch tiles x 2 reduction (P) tiles and the
    # resident-ew0 / lane-dense-output / accumulator paths are all exercised.
    B, P = 256, 512
    EMB_HIDDEN, EMB_SIZE = 32, 16
    EVAL_HIDDEN_DIMS = [32, 16]

    key = jax.random.PRNGKey(0)
    k_params, k_p1, k_p2 = jax.random.split(key, 3)

    params = init_params(k_params, P, EMB_HIDDEN, EMB_SIZE, EVAL_HIDDEN_DIMS)
    mlp_parameters_1 = jax.random.normal(k_p1, (B, P), jnp.float32)
    mlp_parameters_2 = jax.random.normal(k_p2, (B, P), jnp.float32)

    out = comparing_start_state_pcvf_forward(
        mlp_parameters_1, mlp_parameters_2, params, tile_b=128, tile_p=256)
    out = jax.block_until_ready(out)
    assert out.shape == (B, 1)

    # Tight check vs a reference using the same bf16 matmul-operand precision.
    ref_bf16 = reference_forward(mlp_parameters_1, mlp_parameters_2, params,
                                 compute_dtype=jnp.bfloat16)
    assert jnp.allclose(out, ref_bf16, atol=2e-3, rtol=2e-3), (
        float(jnp.max(jnp.abs(out - ref_bf16))))

    # Loose check vs the full-f32 module math (bf16 operand rounding only).
    ref_f32 = reference_forward(mlp_parameters_1, mlp_parameters_2, params,
                                compute_dtype=jnp.float32)
    assert jnp.allclose(out, ref_f32, atol=3e-2, rtol=3e-2), (
        float(jnp.max(jnp.abs(out - ref_f32))))

    print("KERNEL_OK")
</pallas_src>

<mosaic_0001>
module attributes {stable_mosaic.version = 11 : i64} {
  func.func @_pcvf_kernel(%arg0: i32, %arg1: i32, %arg2: memref<128x256xf32, #tpu.memory_space<vmem>>, %arg3: memref<128x256xf32, #tpu.memory_space<vmem>>, %arg4: memref<512x32xbf16, #tpu.memory_space<vmem>>, %arg5: memref<1x32xf32, #tpu.memory_space<vmem>>, %arg6: memref<32x16xbf16, #tpu.memory_space<vmem>>, %arg7: memref<1x16xf32, #tpu.memory_space<vmem>>, %arg8: memref<16x32xbf16, #tpu.memory_space<vmem>>, %arg9: memref<16x32xbf16, #tpu.memory_space<vmem>>, %arg10: memref<1x32xf32, #tpu.memory_space<vmem>>, %arg11: memref<32x16xbf16, #tpu.memory_space<vmem>>, %arg12: memref<1x16xf32, #tpu.memory_space<vmem>>, %arg13: memref<1x16xf32, #tpu.memory_space<vmem>>, %arg14: memref<1x1xf32, #tpu.memory_space<vmem>>, %arg15: memref<1x128xf32, #tpu.memory_space<vmem>>, %arg16: memref<128x32xf32, #tpu.memory_space<vmem>>, %arg17: memref<128x32xf32, #tpu.memory_space<vmem>>) attributes {dimension_semantics = [#tpu.dimension_semantics<parallel>, #tpu.dimension_semantics<arbitrary>], iteration_bounds = array<i64: 2, 2>, scalar_prefetch = 0 : i64, scratch_operands = 2 : i64, tpu.core_type = #tpu.core_type<tc>, window_params = [{transform_indices = @transform_0, window_bounds = array<i64: 128, 256>}, {transform_indices = @transform_1, window_bounds = array<i64: 128, 256>}, {pipeline_mode = #tpu.pipeline_mode<synchronous>, transform_indices = @transform_2, window_bounds = array<i64: 512, 32>}, {pipeline_mode = #tpu.pipeline_mode<synchronous>, transform_indices = @transform_3, window_bounds = array<i64: 1, 32>}, {pipeline_mode = #tpu.pipeline_mode<synchronous>, transform_indices = @transform_4, window_bounds = array<i64: 32, 16>}, {pipeline_mode = #tpu.pipeline_mode<synchronous>, transform_indices = @transform_5, window_bounds = array<i64: 1, 16>}, {pipeline_mode = #tpu.pipeline_mode<synchronous>, transform_indices = @transform_6, window_bounds = array<i64: 16, 32>}, {pipeline_mode = #tpu.pipeline_mode<synchronous>, transform_indices = @transform_7, window_bounds = array<i64: 16, 32>}, {pipeline_mode = #tpu.pipeline_mode<synchronous>, transform_indices = @transform_8, window_bounds = array<i64: 1, 32>}, {pipeline_mode = #tpu.pipeline_mode<synchronous>, transform_indices = @transform_9, window_bounds = array<i64: 32, 16>}, {pipeline_mode = #tpu.pipeline_mode<synchronous>, transform_indices = @transform_10, window_bounds = array<i64: 1, 16>}, {pipeline_mode = #tpu.pipeline_mode<synchronous>, transform_indices = @transform_11, window_bounds = array<i64: 1, 16>}, {pipeline_mode = #tpu.pipeline_mode<synchronous>, transform_indices = @transform_12, window_bounds = array<i64: 1, 1>}, {transform_indices = @transform_13, window_bounds = array<i64: 1, 128>}]} {
    %c0_i32 = arith.constant 0 : i32
    %0 = arith.cmpi eq, %arg1, %c0_i32 : i32
    %1 = arith.extui %0 : i1 to i32
    %c0_i32_0 = arith.constant 0 : i32
    %2 = arith.cmpi ne, %1, %c0_i32_0 : i32
    scf.if %2 {
      %cst_15 = arith.constant 0.000000e+00 : f32
      %22 = vector.broadcast %cst_15 : f32 to vector<128x32xf32>
      %c0_16 = arith.constant 0 : index
      %c0_17 = arith.constant 0 : index
      %23 = vector.load %arg16[%c0_16, %c0_17] : memref<128x32xf32, #tpu.memory_space<vmem>>, vector<128x32xf32>
      tpu.vector_store %arg16[%c0_16, %c0_17], %22 {strides = array<i32>} : memref<128x32xf32, #tpu.memory_space<vmem>>, vector<128x32xf32>,
      %cst_18 = arith.constant 0.000000e+00 : f32
      %24 = vector.broadcast %cst_18 : f32 to vector<128x32xf32>
      %c0_19 = arith.constant 0 : index
      %c0_20 = arith.constant 0 : index
      %25 = vector.load %arg17[%c0_19, %c0_20] : memref<128x32xf32, #tpu.memory_space<vmem>>, vector<128x32xf32>
      tpu.vector_store %arg17[%c0_19, %c0_20], %24 {strides = array<i32>} : memref<128x32xf32, #tpu.memory_space<vmem>>, vector<128x32xf32>,
    } else {
    }
    %c256_i32 = arith.constant 256 : i32
    %3 = arith.muli %arg1, %c256_i32 : i32
    %4 = tpu.assume_multiple %3, 256 : i32
    %5 = arith.index_cast %4 : i32 to index
    %c0 = arith.constant 0 : index
    %6 = vector.load %arg4[%5, %c0] : memref<512x32xbf16, #tpu.memory_space<vmem>>, vector<256x32xbf16>
    %c0_1 = arith.constant 0 : index
    %c0_2 = arith.constant 0 : index
    %7 = vector.load %arg16[%c0_1, %c0_2] : memref<128x32xf32, #tpu.memory_space<vmem>>, vector<128x32xf32>
    %c0_3 = arith.constant 0 : index
    %c0_4 = arith.constant 0 : index
    %8 = vector.load %arg2[%c0_3, %c0_4] : memref<128x256xf32, #tpu.memory_space<vmem>>, vector<128x256xf32>
    %9 = arith.truncf %8 : vector<128x256xf32> to vector<128x256xbf16>
    %cst = arith.constant dense<0.000000e+00> : vector<128x32xf32>
    %10 = tpu.matmul %9, %6, %cst {dimension_numbers = #tpu.dot_dimension_numbers<[1], [0], [0], [1], [0, 0, 1, 1], [], []>} : vector<128x256xbf16>, vector<256x32xbf16>, vector<128x32xf32> -> vector<128x32xf32>
    %11 = arith.addf %7, %10 : vector<128x32xf32>
    %c0_5 = arith.constant 0 : index
    %c0_6 = arith.constant 0 : index
    %12 = vector.load %arg16[%c0_5, %c0_6] : memref<128x32xf32, #tpu.memory_space<vmem>>, vector<128x32xf32>
    tpu.vector_store %arg16[%c0_5, %c0_6], %11 {strides = array<i32>} : memref<128x32xf32, #tpu.memory_space<vmem>>, vector<128x32xf32>,
    %c0_7 = arith.constant 0 : index
    %c0_8 = arith.constant 0 : index
    %13 = vector.load %arg17[%c0_7, %c0_8] : memref<128x32xf32, #tpu.memory_space<vmem>>, vector<128x32xf32>
    %c0_9 = arith.constant 0 : index
    %c0_10 = arith.constant 0 : index
    %14 = vector.load %arg3[%c0_9, %c0_10] : memref<128x256xf32, #tpu.memory_space<vmem>>, vector<128x256xf32>
    %15 = arith.truncf %14 : vector<128x256xf32> to vector<128x256xbf16>
    %cst_11 = arith.constant dense<0.000000e+00> : vector<128x32xf32>
    %16 = tpu.matmul %15, %6, %cst_11 {dimension_numbers = #tpu.dot_dimension_numbers<[1], [0], [0], [1], [0, 0, 1, 1], [], []>} : vector<128x256xbf16>, vector<256x32xbf16>, vector<128x32xf32> -> vector<128x32xf32>
    %17 = arith.addf %13, %16 : vector<128x32xf32>
    %c0_12 = arith.constant 0 : index
    %c0_13 = arith.constant 0 : index
    %18 = vector.load %arg17[%c0_12, %c0_13] : memref<128x32xf32, #tpu.memory_space<vmem>>, vector<128x32xf32>
    tpu.vector_store %arg17[%c0_12, %c0_13], %17 {strides = array<i32>} : memref<128x32xf32, #tpu.memory_space<vmem>>, vector<128x32xf32>,
    %c1_i32 = arith.constant 1 : i32
    %19 = arith.cmpi eq, %arg1, %c1_i32 : i32
    %20 = arith.extui %19 : i1 to i32
    %c0_i32_14 = arith.constant 0 : i32
    %21 = arith.cmpi ne, %20, %c0_i32_14 : i32
    scf.if %21 {
      %c0_15 = arith.constant 0 : index
      %c0_16 = arith.constant 0 : index
      %22 = vector.load %arg16[%c0_15, %c0_16] : memref<128x32xf32, #tpu.memory_space<vmem>>, vector<128x32xf32>
      %c0_17 = arith.constant 0 : index
      %c0_18 = arith.constant 0 : index
      %23 = vector.load %arg5[%c0_17, %c0_18] : memref<1x32xf32, #tpu.memory_space<vmem>>, vector<1x32xf32>
      %24 = vector.broadcast %23 : vector<1x32xf32> to vector<128x32xf32>
      %25 = arith.addf %22, %24 : vector<128x32xf32>
      %cst_19 = arith.constant 0.000000e+00 : f32
      %26 = vector.broadcast %cst_19 : f32 to vector<128x32xf32>
      %27 = arith.maximumf %25, %26 : vector<128x32xf32>
      %28 = arith.truncf %27 : vector<128x32xf32> to vector<128x32xbf16>
      %c0_20 = arith.constant 0 : index
      %c0_21 = arith.constant 0 : index
      %29 = vector.load %arg6[%c0_20, %c0_21] : memref<32x16xbf16, #tpu.memory_space<vmem>>, vector<32x16xbf16>
      %cst_22 = arith.constant dense<0.000000e+00> : vector<128x16xf32>
      %30 = tpu.matmul %28, %29, %cst_22 {dimension_numbers = #tpu.dot_dimension_numbers<[1], [0], [0], [1], [0, 0, 1, 1], [], []>} : vector<128x32xbf16>, vector<32x16xbf16>, vector<128x16xf32> -> vector<128x16xf32>
      %c0_23 = arith.constant 0 : index
      %c0_24 = arith.constant 0 : index
      %31 = vector.load %arg7[%c0_23, %c0_24] : memref<1x16xf32, #tpu.memory_space<vmem>>, vector<1x16xf32>
      %32 = vector.broadcast %31 : vector<1x16xf32> to vector<128x16xf32>
      %33 = arith.addf %30, %32 : vector<128x16xf32>
      %34 = arith.truncf %33 : vector<128x16xf32> to vector<128x16xbf16>
      %c0_25 = arith.constant 0 : index
      %c0_26 = arith.constant 0 : index
      %35 = vector.load %arg17[%c0_25, %c0_26] : memref<128x32xf32, #tpu.memory_space<vmem>>, vector<128x32xf32>
      %c0_27 = arith.constant 0 : index
      %c0_28 = arith.constant 0 : index
      %36 = vector.load %arg5[%c0_27, %c0_28] : memref<1x32xf32, #tpu.memory_space<vmem>>, vector<1x32xf32>
      %37 = vector.broadcast %36 : vector<1x32xf32> to vector<128x32xf32>
      %38 = arith.addf %35, %37 : vector<128x32xf32>
      %cst_29 = arith.constant 0.000000e+00 : f32
      %39 = vector.broadcast %cst_29 : f32 to vector<128x32xf32>
      %40 = arith.maximumf %38, %39 : vector<128x32xf32>
      %41 = arith.truncf %40 : vector<128x32xf32> to vector<128x32xbf16>
      %c0_30 = arith.constant 0 : index
      %c0_31 = arith.constant 0 : index
      %42 = vector.load %arg6[%c0_30, %c0_31] : memref<32x16xbf16, #tpu.memory_space<vmem>>, vector<32x16xbf16>
      %cst_32 = arith.constant dense<0.000000e+00> : vector<128x16xf32>
      %43 = tpu.matmul %41, %42, %cst_32 {dimension_numbers = #tpu.dot_dimension_numbers<[1], [0], [0], [1], [0, 0, 1, 1], [], []>} : vector<128x32xbf16>, vector<32x16xbf16>, vector<128x16xf32> -> vector<128x16xf32>
      %c0_33 = arith.constant 0 : index
      %c0_34 = arith.constant 0 : index
      %44 = vector.load %arg7[%c0_33, %c0_34] : memref<1x16xf32, #tpu.memory_space<vmem>>, vector<1x16xf32>
      %45 = vector.broadcast %44 : vector<1x16xf32> to vector<128x16xf32>
      %46 = arith.addf %43, %45 : vector<128x16xf32>
      %47 = arith.truncf %46 : vector<128x16xf32> to vector<128x16xbf16>
      %c0_35 = arith.constant 0 : index
      %c0_36 = arith.constant 0 : index
      %48 = vector.load %arg8[%c0_35, %c0_36] : memref<16x32xbf16, #tpu.memory_space<vmem>>, vector<16x32xbf16>
      %cst_37 = arith.constant dense<0.000000e+00> : vector<128x32xf32>
      %49 = tpu.matmul %34, %48, %cst_37 {dimension_numbers = #tpu.dot_dimension_numbers<[1], [0], [0], [1], [0, 0, 1, 1], [], []>} : vector<128x16xbf16>, vector<16x32xbf16>, vector<128x32xf32> -> vector<128x32xf32>
      %c0_38 = arith.constant 0 : index
      %c0_39 = arith.constant 0 : index
      %50 = vector.load %arg9[%c0_38, %c0_39] : memref<16x32xbf16, #tpu.memory_space<vmem>>, vector<16x32xbf16>
      %cst_40 = arith.constant dense<0.000000e+00> : vector<128x32xf32>
      %51 = tpu.matmul %47, %50, %cst_40 {dimension_numbers = #tpu.dot_dimension_numbers<[1], [0], [0], [1], [0, 0, 1, 1], [], []>} : vector<128x16xbf16>, vector<16x32xbf16>, vector<128x32xf32> -> vector<128x32xf32>
      %52 = arith.addf %49, %51 : vector<128x32xf32>
      %c0_41 = arith.constant 0 : index
      %c0_42 = arith.constant 0 : index
      %53 = vector.load %arg10[%c0_41, %c0_42] : memref<1x32xf32, #tpu.memory_space<vmem>>, vector<1x32xf32>
      %54 = vector.broadcast %53 : vector<1x32xf32> to vector<128x32xf32>
      %55 = arith.addf %52, %54 : vector<128x32xf32>
      %cst_43 = arith.constant 0.000000e+00 : f32
      %56 = vector.broadcast %cst_43 : f32 to vector<128x32xf32>
      %57 = arith.maximumf %55, %56 : vector<128x32xf32>
      %58 = arith.truncf %57 : vector<128x32xf32> to vector<128x32xbf16>
      %c0_44 = arith.constant 0 : index
      %c0_45 = arith.constant 0 : index
      %59 = vector.load %arg11[%c0_44, %c0_45] : memref<32x16xbf16, #tpu.memory_space<vmem>>, vector<32x16xbf16>
      %cst_46 = arith.constant dense<0.000000e+00> : vector<128x16xf32>
      %60 = tpu.matmul %58, %59, %cst_46 {dimension_numbers = #tpu.dot_dimension_numbers<[1], [0], [0], [1], [0, 0, 1, 1], [], []>} : vector<128x32xbf16>, vector<32x16xbf16>, vector<128x16xf32> -> vector<128x16xf32>
      %c0_47 = arith.constant 0 : index
      %c0_48 = arith.constant 0 : index
      %61 = vector.load %arg12[%c0_47, %c0_48] : memref<1x16xf32, #tpu.memory_space<vmem>>, vector<1x16xf32>
      %62 = vector.broadcast %61 : vector<1x16xf32> to vector<128x16xf32>
      %63 = arith.addf %60, %62 : vector<128x16xf32>
      %cst_49 = arith.constant 0.000000e+00 : f32
      %64 = vector.broadcast %cst_49 : f32 to vector<128x16xf32>
      %65 = arith.maximumf %63, %64 : vector<128x16xf32>
      %c0_50 = arith.constant 0 : index
      %c0_51 = arith.constant 0 : index
      %66 = vector.load %arg13[%c0_50, %c0_51] : memref<1x16xf32, #tpu.memory_space<vmem>>, vector<1x16xf32>
      %67 = vector.broadcast %66 : vector<1x16xf32> to vector<128x16xf32>
      %68 = arith.mulf %65, %67 : vector<128x16xf32>
      %cst_52 = arith.constant dense<0.000000e+00> : vector<128xf32>
      %69 = vector.multi_reduction <add>, %68, %cst_52 [1] : vector<128x16xf32> to vector<128xf32>
      %70 = vector.shape_cast %69 : vector<128xf32> to vector<1x128xf32>
      %c0_53 = arith.constant 0 : index
      %c0_54 = arith.constant 0 : index
      %71 = vector.load %arg14[%c0_53, %c0_54] : memref<1x1xf32, #tpu.memory_space<vmem>>, vector<1x1xf32>
      %72 = vector.broadcast %71 : vector<1x1xf32> to vector<1x128xf32>
      %73 = arith.addf %70, %72 : vector<1x128xf32>
      %c0_55 = arith.constant 0 : index
      %c0_56 = arith.constant 0 : index
      %74 = vector.load %arg15[%c0_55, %c0_56] : memref<1x128xf32, #tpu.memory_space<vmem>>, vector<1x128xf32>
      tpu.vector_store %arg15[%c0_55, %c0_56], %73 {strides = array<i32>} : memref<1x128xf32, #tpu.memory_space<vmem>>, vector<1x128xf32>,
    } else {
    }
    return
  }
  func.func @transform_0(%arg0: i32, %arg1: i32) -> (i32, i32) {
    %c0_i32 = arith.constant 0 : i32
    return %arg0, %arg1 : i32, i32
  }
  func.func @transform_1(%arg0: i32, %arg1: i32) -> (i32, i32) {
    %c0_i32 = arith.constant 0 : i32
    return %arg0, %arg1 : i32, i32
  }
  func.func @transform_2(%arg0: i32, %arg1: i32) -> (i32, i32) {
    %c0_i32 = arith.constant 0 : i32
    %c0_i32_0 = arith.constant 0 : i32
    %c0_i32_1 = arith.constant 0 : i32
    return %c0_i32, %c0_i32_0 : i32, i32
  }
  func.func @transform_3(%arg0: i32, %arg1: i32) -> (i32, i32) {
    %c0_i32 = arith.constant 0 : i32
    %c0_i32_0 = arith.constant 0 : i32
    %c0_i32_1 = arith.constant 0 : i32
    return %c0_i32, %c0_i32_0 : i32, i32
  }
  func.func @transform_4(%arg0: i32, %arg1: i32) -> (i32, i32) {
    %c0_i32 = arith.constant 0 : i32
    %c0_i32_0 = arith.constant 0 : i32
    %c0_i32_1 = arith.constant 0 : i32
    return %c0_i32, %c0_i32_0 : i32, i32
  }
  func.func @transform_5(%arg0: i32, %arg1: i32) -> (i32, i32) {
    %c0_i32 = arith.constant 0 : i32
    %c0_i32_0 = arith.constant 0 : i32
    %c0_i32_1 = arith.constant 0 : i32
    return %c0_i32, %c0_i32_0 : i32, i32
  }
  func.func @transform_6(%arg0: i32, %arg1: i32) -> (i32, i32) {
    %c0_i32 = arith.constant 0 : i32
    %c0_i32_0 = arith.constant 0 : i32
    %c0_i32_1 = arith.constant 0 : i32
    return %c0_i32, %c0_i32_0 : i32, i32
  }
  func.func @transform_7(%arg0: i32, %arg1: i32) -> (i32, i32) {
    %c0_i32 = arith.constant 0 : i32
    %c0_i32_0 = arith.constant 0 : i32
    %c0_i32_1 = arith.constant 0 : i32
    return %c0_i32, %c0_i32_0 : i32, i32
  }
  func.func @transform_8(%arg0: i32, %arg1: i32) -> (i32, i32) {
    %c0_i32 = arith.constant 0 : i32
    %c0_i32_0 = arith.constant 0 : i32
    %c0_i32_1 = arith.constant 0 : i32
    return %c0_i32, %c0_i32_0 : i32, i32
  }
  func.func @transform_9(%arg0: i32, %arg1: i32) -> (i32, i32) {
    %c0_i32 = arith.constant 0 : i32
    %c0_i32_0 = arith.constant 0 : i32
    %c0_i32_1 = arith.constant 0 : i32
    return %c0_i32, %c0_i32_0 : i32, i32
  }
  func.func @transform_10(%arg0: i32, %arg1: i32) -> (i32, i32) {
    %c0_i32 = arith.constant 0 : i32
    %c0_i32_0 = arith.constant 0 : i32
    %c0_i32_1 = arith.constant 0 : i32
    return %c0_i32, %c0_i32_0 : i32, i32
  }
  func.func @transform_11(%arg0: i32, %arg1: i32) -> (i32, i32) {
    %c0_i32 = arith.constant 0 : i32
    %c0_i32_0 = arith.constant 0 : i32
    %c0_i32_1 = arith.constant 0 : i32
    return %c0_i32, %c0_i32_0 : i32, i32
  }
  func.func @transform_12(%arg0: i32, %arg1: i32) -> (i32, i32) {
    %c0_i32 = arith.constant 0 : i32
    %c0_i32_0 = arith.constant 0 : i32
    %c0_i32_1 = arith.constant 0 : i32
    return %c0_i32, %c0_i32_0 : i32, i32
  }
  func.func @transform_13(%arg0: i32, %arg1: i32) -> (i32, i32) {
    %c0_i32 = arith.constant 0 : i32
    %c0_i32_0 = arith.constant 0 : i32
    return %c0_i32, %arg0 : i32, i32
  }
}

</mosaic_0001>

<llo_original>
// kernel: tpu_custom_call.1
$region0: #{tpu_custom_call.1}
  #allocation0 [shape = 'u32[]', space=smem, size = 0x4, offset = 0x4, fixed_abs, tag = 'smem constant byte address 0x4 - core index']
  #allocation1 [shape = 'u32[144,128]{1,0:T(1,128)}', space=vmem, size = 0x12000, scoped, tag = 'internal scratch']
  #allocation2 [shape = 'f32[128,32]{1,0:T(8,128)}', space=vmem, size = 0x10000, scoped, tag = 'scratch operand']
  #allocation3 [shape = 'f32[128,32]{1,0:T(8,128)}', space=vmem, size = 0x10000, scoped, tag = 'scratch operand']
  #allocation4 [shape = 'f32[1,1]{1,0:T(1,128)S(1)}', space=vmem, size = 0x200, scoped, tag = 'scoped memory for tpu_custom_call.1']
  %s0 = inlined_call_operand.hbm [shape: f32[256,512], index: 0, kind: input, shape index: {}]
  %s1 = inlined_call_operand.hbm [shape: f32[256,512], index: 1, kind: input, shape index: {}]
  %s2 = inlined_call_operand.vmem [shape: bf16[512,32], index: 2, kind: input, shape index: {}]
  %s3 = inlined_call_operand.vmem [shape: f32[1,32], index: 3, kind: input, shape index: {}]
  %s4 = inlined_call_operand.vmem [shape: bf16[32,16], index: 4, kind: input, shape index: {}]
  %s5 = inlined_call_operand.vmem [shape: f32[1,16], index: 5, kind: input, shape index: {}]
  %s6 = inlined_call_operand.vmem [shape: bf16[16,32], index: 6, kind: input, shape index: {}]
  %s7 = inlined_call_operand.vmem [shape: bf16[16,32], index: 7, kind: input, shape index: {}]
  %s8 = inlined_call_operand.vmem [shape: f32[1,32], index: 8, kind: input, shape index: {}]
  %s9 = inlined_call_operand.vmem [shape: bf16[32,16], index: 9, kind: input, shape index: {}]
  %s10 = inlined_call_operand.vmem [shape: f32[1,16], index: 10, kind: input, shape index: {}]
  %s11 = inlined_call_operand.vmem [shape: f32[1,16], index: 11, kind: input, shape index: {}]
  %s12 = inlined_call_operand.<no memory space> [shape: f32[1,1], index: 12, kind: input, shape index: {}]
  %s13 = inlined_call_operand.hbm [shape: f32[1,256], index: 13, kind: output, shape index: {}]
  %s14 = sld [smem:[#allocation0]]
  $region101: #{tpu_custom_call.1} parent=0
    _
  %s16 = ssub.s32 1, %s14
  %s17 = scalar_select 0, %s16, %s14
  %v18 = vstv %s12
  %19 = vst [vmem:[#allocation4] sm:$0x1] %v18
  $region1: #{tpu_custom_call.1} parent=0
    #allocation5 [shape = 'u8[262144]{0}', space=vmem, size = 0x40000, scoped, tag = 'input window, operand 0']
    #allocation6 [shape = 's32[2]{0}', space=sflag, size = 0x8, scoped, tag = 'scoped memory for tpu_custom_call.1']
    #allocation7 [shape = 's32[2]{0}', space=sflag, size = 0x8, scoped, tag = 'scoped memory for tpu_custom_call.1']
    #allocation8 [shape = 'u8[262144]{0}', space=vmem, size = 0x40000, scoped, tag = 'input window, operand 1']
    #allocation9 [shape = 's32[2]{0}', space=sflag, size = 0x8, scoped, tag = 'scoped memory for tpu_custom_call.1']
    #allocation10 [shape = 'u8[1024]{0}', space=vmem, size = 0x400, scoped, tag = 'output window, operand 0']
    %20 = vsyncpa [#allocation6], 0
    %s21 = scalar_lea.sflag [#allocation6], 1
    %22 = vsyncpa %s21, 0
    %23 = vsyncpa [#allocation9], 0
    %s24 = scalar_lea.sflag [#allocation9], 1
    %25 = vsyncpa %s24, 0
    %26 = vsyncpa [#allocation7], 0
    %s27 = scalar_lea.sflag [#allocation7], 1
    %28 = vsyncpa %s27, 0
    loop: start=0, step=1, limit=6
    $region2: #{tpu_custom_call.1} parent=1 // loop_pre_header
      _
    $region3: #{tpu_custom_call.1} parent=1 // loop_header
      %s30 = sphi 0, %s34
      %p31 = scmp.ge.s32.totalorder %s30, 6
      %s37 = sphi 0, %s49
      %s38 = sphi 0, %s45
      %s39 = sphi 0, %s37
      %s40 = sphi 0, %s38
      %s41 = sphi 0, %s39
      %s42 = sphi 0, %s40
      %s54 = sphi 0, %s56
      %s57 = sphi 0, %s54
      %s58 = sphi 0, %s57
      %s74 = sphi 0, %s58
      %s82 = sphi 0, %s84
      %s85 = sphi 0, %s82
      %s86 = sphi 0, %s85
      %s102 = sphi 0, %s86
      %s106 = sphi 0, %s106
      %s108 = sphi 0, %s106
      %s109 = sphi 0, %s108
      %s123 = sphi 0, %s109
      %s127 = sphi 0, %s127
      %s129 = sphi 0, %s127
      %s130 = sphi 0, %s129
      %s144 = sphi 0, %s130
      %s148 = sphi 0, %s148
      %s150 = sphi 0, %s148
      %s151 = sphi 0, %s150
      %s165 = sphi 0, %s151
      %s169 = sphi 0, %s169
      %s171 = sphi 0, %s169
      %s172 = sphi 0, %s171
      %s186 = sphi 0, %s172
      %s190 = sphi 0, %s190
      %s192 = sphi 0, %s190
      %s193 = sphi 0, %s192
      %s207 = sphi 0, %s193
      %s211 = sphi 0, %s211
      %s213 = sphi 0, %s211
      %s214 = sphi 0, %s213
      %s228 = sphi 0, %s214
      %s232 = sphi 0, %s232
      %s234 = sphi 0, %s232
      %s235 = sphi 0, %s234
      %s249 = sphi 0, %s235
      %s253 = sphi 0, %s253
      %s255 = sphi 0, %s253
      %s256 = sphi 0, %s255
      %s270 = sphi 0, %s256
      %s274 = sphi 0, %s274
      %s276 = sphi 0, %s274
      %s277 = sphi 0, %s276
      %s291 = sphi 0, %s277
      %s295 = sphi 0, %s295
      %s297 = sphi 0, %s295
      %s298 = sphi 0, %s297
      %s312 = sphi 0, %s298
      %s316 = sphi 0, %s316
      %s318 = sphi 0, %s316
      %s319 = sphi 0, %s318
      %s333 = sphi 0, %s319
      %s339 = sphi 0, %s341
      %s342 = sphi 0, %s339
      %s343 = sphi 0, %s342
      %s359 = sphi 0, %s343
    $region4: #{tpu_custom_call.1} parent=1 // loop_header_branch
      %33 = sbr.rel (%p31) target = $region8
    $region5: #{tpu_custom_call.1} parent=1 // loop_body
      %s35 = ssub.s32 %s30, 1
      %s36 = ssub.s32 %s30, 2
      %s43 = sadd.s32 1, %s38
      %p44 = scmp.ge.s32.totalorder %s43, 2
      %s45 = scalar_select %p44, 0, %s43
      %s46 = sadd.s32 1, %s37
      %s47 = scalar_select %p44, %s46, %s37
      %p48 = scmp.ge.s32.totalorder %s47, 2
      %s49 = scalar_select %p48, 0, %s47
      %s50 = ssub.s32 %s37, %s49
      %s51 = ssub.s32 %s38, %s45
      %s52 = sor.u32 %s50, %s51
      %p53 = scmp.eq.s32.totalorder %s52, 0
      %s55 = sadd.s32 %s54, 1
      %s56 = scalar_select %p53, %s54, %s55
      %p59 = pneg %p53
      %p60 = scmp.eq.s32.totalorder %s30, 3
      %p61 = por %p59, %p60
      %p62 = scmp.ne.s32.totalorder %s54, %s57
      %p63 = scmp.eq.s32.totalorder %s30, 0
      %p64 = por %p62, %p63
      %p65 = scmp.ne.s32.totalorder %s54, %s57
      %p66 = scmp.eq.s32.totalorder %s35, 3
      %p67 = por %p65, %p66
      %p68 = scmp.ne.s32.totalorder %s57, %s58
      %p69 = scmp.eq.s32.totalorder %s35, 0
      %p70 = por %p68, %p69
      %p71 = scmp.ne.s32.totalorder %s57, %s58
      %p72 = scmp.eq.s32.totalorder %s36, 3
      %p73 = por %p71, %p72
      %p75 = scmp.ne.s32.totalorder %s58, %s74
      %p76 = scmp.eq.s32.totalorder %s36, 0
      %p77 = por %p75, %p76
      %s78 = ssub.s32 %s37, %s49
      %s79 = ssub.s32 %s38, %s45
      %s80 = sor.u32 %s78, %s79
      %p81 = scmp.eq.s32.totalorder %s80, 0
      %s83 = sadd.s32 %s82, 1
      %s84 = scalar_select %p81, %s82, %s83
      %p87 = pneg %p81
      %p88 = scmp.eq.s32.totalorder %s30, 3
      %p89 = por %p87, %p88
      %p90 = scmp.ne.s32.totalorder %s82, %s85
      %p91 = scmp.eq.s32.totalorder %s30, 0
      %p92 = por %p90, %p91
      %p93 = scmp.ne.s32.totalorder %s82, %s85
      %p94 = scmp.eq.s32.totalorder %s35, 3
      %p95 = por %p93, %p94
      %p96 = scmp.ne.s32.totalorder %s85, %s86
      %p97 = scmp.eq.s32.totalorder %s35, 0
      %p98 = por %p96, %p97
      %p99 = scmp.ne.s32.totalorder %s85, %s86
      %p100 = scmp.eq.s32.totalorder %s36, 3
      %p101 = por %p99, %p100
      %p103 = scmp.ne.s32.totalorder %s86, %s102
      %p104 = scmp.eq.s32.totalorder %s36, 0
      %p105 = por %p103, %p104
      %s107 = sadd.s32 %s106, 1
      %p110 = scmp.eq.s32.totalorder %s30, 3
      %p111 = scmp.ne.s32.totalorder %s106, %s108
      %p112 = scmp.eq.s32.totalorder %s30, 0
      %p113 = por %p111, %p112
      %p114 = scmp.ne.s32.totalorder %s106, %s108
      %p115 = scmp.eq.s32.totalorder %s35, 3
      %p116 = por %p114, %p115
      %p117 = scmp.ne.s32.totalorder %s108, %s109
      %p118 = scmp.eq.s32.totalorder %s35, 0
      %p119 = por %p117, %p118
      %p120 = scmp.ne.s32.totalorder %s108, %s109
      %p121 = scmp.eq.s32.totalorder %s36, 3
      %p122 = por %p120, %p121
      %p124 = scmp.ne.s32.totalorder %s109, %s123
      %p125 = scmp.eq.s32.totalorder %s36, 0
      %p126 = por %p124, %p125
      %s128 = sadd.s32 %s127, 1
      %p131 = scmp.eq.s32.totalorder %s30, 3
      %p132 = scmp.ne.s32.totalorder %s127, %s129
      %p133 = scmp.eq.s32.totalorder %s30, 0
      %p134 = por %p132, %p133
      %p135 = scmp.ne.s32.totalorder %s127, %s129
      %p136 = scmp.eq.s32.totalorder %s35, 3
      %p137 = por %p135, %p136
      %p138 = scmp.ne.s32.totalorder %s129, %s130
      %p139 = scmp.eq.s32.totalorder %s35, 0
      %p140 = por %p138, %p139
      %p141 = scmp.ne.s32.totalorder %s129, %s130
      %p142 = scmp.eq.s32.totalorder %s36, 3
      %p143 = por %p141, %p142
      %p145 = scmp.ne.s32.totalorder %s130, %s144
      %p146 = scmp.eq.s32.totalorder %s36, 0
      %p147 = por %p145, %p146
      %s149 = sadd.s32 %s148, 1
      %p152 = scmp.eq.s32.totalorder %s30, 3
      %p153 = scmp.ne.s32.totalorder %s148, %s150
      %p154 = scmp.eq.s32.totalorder %s30, 0
      %p155 = por %p153, %p154
      %p156 = scmp.ne.s32.totalorder %s148, %s150
      %p157 = scmp.eq.s32.totalorder %s35, 3
      %p158 = por %p156, %p157
      %p159 = scmp.ne.s32.totalorder %s150, %s151
      %p160 = scmp.eq.s32.totalorder %s35, 0
      %p161 = por %p159, %p160
      %p162 = scmp.ne.s32.totalorder %s150, %s151
      %p163 = scmp.eq.s32.totalorder %s36, 3
      %p164 = por %p162, %p163
      %p166 = scmp.ne.s32.totalorder %s151, %s165
      %p167 = scmp.eq.s32.totalorder %s36, 0
      %p168 = por %p166, %p167
      %s170 = sadd.s32 %s169, 1
      %p173 = scmp.eq.s32.totalorder %s30, 3
      %p174 = scmp.ne.s32.totalorder %s169, %s171
      %p175 = scmp.eq.s32.totalorder %s30, 0
      %p176 = por %p174, %p175
      %p177 = scmp.ne.s32.totalorder %s169, %s171
      %p178 = scmp.eq.s32.totalorder %s35, 3
      %p179 = por %p177, %p178
      %p180 = scmp.ne.s32.totalorder %s171, %s172
      %p181 = scmp.eq.s32.totalorder %s35, 0
      %p182 = por %p180, %p181
      %p183 = scmp.ne.s32.totalorder %s171, %s172
      %p184 = scmp.eq.s32.totalorder %s36, 3
      %p185 = por %p183, %p184
      %p187 = scmp.ne.s32.totalorder %s172, %s186
      %p188 = scmp.eq.s32.totalorder %s36, 0
      %p189 = por %p187, %p188
      %s191 = sadd.s32 %s190, 1
      %p194 = scmp.eq.s32.totalorder %s30, 3
      %p195 = scmp.ne.s32.totalorder %s190, %s192
      %p196 = scmp.eq.s32.totalorder %s30, 0
      %p197 = por %p195, %p196
      %p198 = scmp.ne.s32.totalorder %s190, %s192
      %p199 = scmp.eq.s32.totalorder %s35, 3
      %p200 = por %p198, %p199
      %p201 = scmp.ne.s32.totalorder %s192, %s193
      %p202 = scmp.eq.s32.totalorder %s35, 0
      %p203 = por %p201, %p202
      %p204 = scmp.ne.s32.totalorder %s192, %s193
      %p205 = scmp.eq.s32.totalorder %s36, 3
      %p206 = por %p204, %p205
      %p208 = scmp.ne.s32.totalorder %s193, %s207
      %p209 = scmp.eq.s32.totalorder %s36, 0
      %p210 = por %p208, %p209
      %s212 = sadd.s32 %s211, 1
      %p215 = scmp.eq.s32.totalorder %s30, 3
      %p216 = scmp.ne.s32.totalorder %s211, %s213
      %p217 = scmp.eq.s32.totalorder %s30, 0
      %p218 = por %p216, %p217
      %p219 = scmp.ne.s32.totalorder %s211, %s213
      %p220 = scmp.eq.s32.totalorder %s35, 3
      %p221 = por %p219, %p220
      %p222 = scmp.ne.s32.totalorder %s213, %s214
      %p223 = scmp.eq.s32.totalorder %s35, 0
      %p224 = por %p222, %p223
      %p225 = scmp.ne.s32.totalorder %s213, %s214
      %p226 = scmp.eq.s32.totalorder %s36, 3
      %p227 = por %p225, %p226
      %p229 = scmp.ne.s32.totalorder %s214, %s228
      %p230 = scmp.eq.s32.totalorder %s36, 0
      %p231 = por %p229, %p230
      %s233 = sadd.s32 %s232, 1
      %p236 = scmp.eq.s32.totalorder %s30, 3
      %p237 = scmp.ne.s32.totalorder %s232, %s234
      %p238 = scmp.eq.s32.totalorder %s30, 0
      %p239 = por %p237, %p238
      %p240 = scmp.ne.s32.totalorder %s232, %s234
      %p241 = scmp.eq.s32.totalorder %s35, 3
      %p242 = por %p240, %p241
      %p243 = scmp.ne.s32.totalorder %s234, %s235
      %p244 = scmp.eq.s32.totalorder %s35, 0
      %p245 = por %p243, %p244
      %p246 = scmp.ne.s32.totalorder %s234, %s235
      %p247 = scmp.eq.s32.totalorder %s36, 3
      %p248 = por %p246, %p247
      %p250 = scmp.ne.s32.totalorder %s235, %s249
      %p251 = scmp.eq.s32.totalorder %s36, 0
      %p252 = por %p250, %p251
      %s254 = sadd.s32 %s253, 1
      %p257 = scmp.eq.s32.totalorder %s30, 3
      %p258 = scmp.ne.s32.totalorder %s253, %s255
      %p259 = scmp.eq.s32.totalorder %s30, 0
      %p260 = por %p258, %p259
      %p261 = scmp.ne.s32.totalorder %s253, %s255
      %p262 = scmp.eq.s32.totalorder %s35, 3
      %p263 = por %p261, %p262
      %p264 = scmp.ne.s32.totalorder %s255, %s256
      %p265 = scmp.eq.s32.totalorder %s35, 0
      %p266 = por %p264, %p265
      %p267 = scmp.ne.s32.totalorder %s255, %s256
      %p268 = scmp.eq.s32.totalorder %s36, 3
      %p269 = por %p267, %p268
      %p271 = scmp.ne.s32.totalorder %s256, %s270
      %p272 = scmp.eq.s32.totalorder %s36, 0
      %p273 = por %p271, %p272
      %s275 = sadd.s32 %s274, 1
      %p278 = scmp.eq.s32.totalorder %s30, 3
      %p279 = scmp.ne.s32.totalorder %s274, %s276
      %p280 = scmp.eq.s32.totalorder %s30, 0
      %p281 = por %p279, %p280
      %p282 = scmp.ne.s32.totalorder %s274, %s276
      %p283 = scmp.eq.s32.totalorder %s35, 3
      %p284 = por %p282, %p283
      %p285 = scmp.ne.s32.totalorder %s276, %s277
      %p286 = scmp.eq.s32.totalorder %s35, 0
      %p287 = por %p285, %p286
      %p288 = scmp.ne.s32.totalorder %s276, %s277
      %p289 = scmp.eq.s32.totalorder %s36, 3
      %p290 = por %p288, %p289
      %p292 = scmp.ne.s32.totalorder %s277, %s291
      %p293 = scmp.eq.s32.totalorder %s36, 0
      %p294 = por %p292, %p293
      %s296 = sadd.s32 %s295, 1
      %p299 = scmp.eq.s32.totalorder %s30, 3
      %p300 = scmp.ne.s32.totalorder %s295, %s297
      %p301 = scmp.eq.s32.totalorder %s30, 0
      %p302 = por %p300, %p301
      %p303 = scmp.ne.s32.totalorder %s295, %s297
      %p304 = scmp.eq.s32.totalorder %s35, 3
      %p305 = por %p303, %p304
      %p306 = scmp.ne.s32.totalorder %s297, %s298
      %p307 = scmp.eq.s32.totalorder %s35, 0
      %p308 = por %p306, %p307
      %p309 = scmp.ne.s32.totalorder %s297, %s298
      %p310 = scmp.eq.s32.totalorder %s36, 3
      %p311 = por %p309, %p310
      %p313 = scmp.ne.s32.totalorder %s298, %s312
      %p314 = scmp.eq.s32.totalorder %s36, 0
      %p315 = por %p313, %p314
      %s317 = sadd.s32 %s316, 1
      %p320 = scmp.eq.s32.totalorder %s30, 3
      %p321 = scmp.ne.s32.totalorder %s316, %s318
      %p322 = scmp.eq.s32.totalorder %s30, 0
      %p323 = por %p321, %p322
      %p324 = scmp.ne.s32.totalorder %s316, %s318
      %p325 = scmp.eq.s32.totalorder %s35, 3
      %p326 = por %p324, %p325
      %p327 = scmp.ne.s32.totalorder %s318, %s319
      %p328 = scmp.eq.s32.totalorder %s35, 0
      %p329 = por %p327, %p328
      %p330 = scmp.ne.s32.totalorder %s318, %s319
      %p331 = scmp.eq.s32.totalorder %s36, 3
      %p332 = por %p330, %p331
      %p334 = scmp.ne.s32.totalorder %s319, %s333
      %p335 = scmp.eq.s32.totalorder %s36, 0
      %p336 = por %p334, %p335
      %s337 = ssub.s32 %s37, %s49
      %p338 = scmp.eq.s32.totalorder %s337, 0
      %s340 = sadd.s32 %s339, 1
      %s341 = scalar_select %p338, %s339, %s340
      %p344 = pneg %p338
      %p345 = scmp.eq.s32.totalorder %s30, 3
      %p346 = por %p344, %p345
      %p347 = scmp.ne.s32.totalorder %s339, %s342
      %p348 = scmp.eq.s32.totalorder %s30, 0
      %p349 = por %p347, %p348
      %p350 = scmp.ne.s32.totalorder %s339, %s342
      %p351 = scmp.eq.s32.totalorder %s35, 3
      %p352 = por %p350, %p351
      %p353 = scmp.ne.s32.totalorder %s342, %s343
      %p354 = scmp.eq.s32.totalorder %s35, 0
      %p355 = por %p353, %p354
      %p356 = scmp.ne.s32.totalorder %s342, %s343
      %p357 = scmp.eq.s32.totalorder %s36, 3
      %p358 = por %p356, %p357
      %p360 = scmp.ne.s32.totalorder %s343, %s359
      %p361 = scmp.eq.s32.totalorder %s36, 0
      %p362 = por %p360, %p361
      %p363 = scmp.le.s32.totalorder 1, %s30
      %p364 = scmp.lt.s32.totalorder %s30, 5
      %p365 = pnand %p363, %p364
      %p366 = pneg %p365
      // Predicated region
      $region9: #{tpu_custom_call.1} parent=5 // pred_check
        _
      $region10: #{tpu_custom_call.1} parent=5 // pred_check_branch
        %368 = sbr.rel (%p365) target = $region12
      $region11: #{tpu_custom_call.1} parent=5 // pred_region
        %s369 = ssub.s32 %s30, 1
        // Predicated region
        $region13: #{tpu_custom_call.1} parent=11 // pred_check
          %p370 = pneg %p119
        $region14: #{tpu_custom_call.1} parent=11 // pred_check_branch
          %372 = sbr.rel (%p370) target = $region16
        $region15: #{tpu_custom_call.1} parent=11 // pred_region
          _
        $region16: #{tpu_custom_call.1} parent=11 // pred_fallthru
          _
        // Predicated region
        $region17: #{tpu_custom_call.1} parent=11 // pred_check
          %p373 = pneg %p140
        $region18: #{tpu_custom_call.1} parent=11 // pred_check_branch
          %375 = sbr.rel (%p373) target = $region20
        $region19: #{tpu_custom_call.1} parent=11 // pred_region
          _
        $region20: #{tpu_custom_call.1} parent=11 // pred_fallthru
          _
        // Predicated region
        $region21: #{tpu_custom_call.1} parent=11 // pred_check
          %p376 = pneg %p161
        $region22: #{tpu_custom_call.1} parent=11 // pred_check_branch
          %378 = sbr.rel (%p376) target = $region24
        $region23: #{tpu_custom_call.1} parent=11 // pred_region
          _
        $region24: #{tpu_custom_call.1} parent=11 // pred_fallthru
          _
        // Predicated region
        $region25: #{tpu_custom_call.1} parent=11 // pred_check
          %p379 = pneg %p182
        $region26: #{tpu_custom_call.1} parent=11 // pred_check_branch
          %381 = sbr.rel (%p379) target = $region28
        $region27: #{tpu_custom_call.1} parent=11 // pred_region
          _
        $region28: #{tpu_custom_call.1} parent=11 // pred_fallthru
          _
        // Predicated region
        $region29: #{tpu_custom_call.1} parent=11 // pred_check
          %p382 = pneg %p203
        $region30: #{tpu_custom_call.1} parent=11 // pred_check_branch
          %384 = sbr.rel (%p382) target = $region32
        $region31: #{tpu_custom_call.1} parent=11 // pred_region
          _
        $region32: #{tpu_custom_call.1} parent=11 // pred_fallthru
          _
        // Predicated region
        $region33: #{tpu_custom_call.1} parent=11 // pred_check
          %p385 = pneg %p224
        $region34: #{tpu_custom_call.1} parent=11 // pred_check_branch
          %387 = sbr.rel (%p385) target = $region36
        $region35: #{tpu_custom_call.1} parent=11 // pred_region
          _
        $region36: #{tpu_custom_call.1} parent=11 // pred_fallthru
          _
        // Predicated region
        $region37: #{tpu_custom_call.1} parent=11 // pred_check
          %p388 = pneg %p245
        $region38: #{tpu_custom_call.1} parent=11 // pred_check_branch
          %390 = sbr.rel (%p388) target = $region40
        $region39: #{tpu_custom_call.1} parent=11 // pred_region
          _
        $region40: #{tpu_custom_call.1} parent=11 // pred_fallthru
          _
        // Predicated region
        $region41: #{tpu_custom_call.1} parent=11 // pred_check
          %p391 = pneg %p266
        $region42: #{tpu_custom_call.1} parent=11 // pred_check_branch
          %393 = sbr.rel (%p391) target = $region44
        $region43: #{tpu_custom_call.1} parent=11 // pred_region
          _
        $region44: #{tpu_custom_call.1} parent=11 // pred_fallthru
          _
        // Predicated region
        $region45: #{tpu_custom_call.1} parent=11 // pred_check
          %p394 = pneg %p287
        $region46: #{tpu_custom_call.1} parent=11 // pred_check_branch
          %396 = sbr.rel (%p394) target = $region48
        $region47: #{tpu_custom_call.1} parent=11 // pred_region
          _
        $region48: #{tpu_custom_call.1} parent=11 // pred_fallthru
          _
        // Predicated region
        $region49: #{tpu_custom_call.1} parent=11 // pred_check
          %p397 = pneg %p308
        $region50: #{tpu_custom_call.1} parent=11 // pred_check_branch
          %399 = sbr.rel (%p397) target = $region52
        $region51: #{tpu_custom_call.1} parent=11 // pred_region
          _
        $region52: #{tpu_custom_call.1} parent=11 // pred_fallthru
          _
        // Predicated region
        $region53: #{tpu_custom_call.1} parent=11 // pred_check
          %p400 = pneg %p329
        $region54: #{tpu_custom_call.1} parent=11 // pred_check_branch
          %402 = sbr.rel (%p400) target = $region56
        $region55: #{tpu_custom_call.1} parent=11 // pred_region
          _
        $region56: #{tpu_custom_call.1} parent=11 // pred_fallthru
          _
      $region12: #{tpu_custom_call.1} parent=5 // pred_fallthru
        _
      %p403 = scmp.lt.s32.totalorder %s30, 4
      // Predicated region
      $region57: #{tpu_custom_call.1} parent=5 // pred_check
        %p404 = pneg %p403
      $region58: #{tpu_custom_call.1} parent=5 // pred_check_branch
        %406 = sbr.rel (%p404) target = $region60
      $region59: #{tpu_custom_call.1} parent=5 // pred_region
        // Predicated region
        $region61: #{tpu_custom_call.1} parent=59 // pred_check
          %p407 = pneg %p64
        $region62: #{tpu_custom_call.1} parent=59 // pred_check_branch
          %409 = sbr.rel (%p407) target = $region64
        $region63: #{tpu_custom_call.1} parent=59 // pred_region
          %s410 = sand.u32 %s54, 1
          %s411 = scalar_lea.sflag [#allocation6], %s410
          %s412 = sand.u32 %s54, 1
          %s413 = smul.addr %s412, 256
          %s414 = scalar_lea.vmem [#allocation5], %s413
          %s415 = smul.u32 16, %s37
          %s416 = smul.u32 2, %s38
          %s418 = ssub.s32 4096, 4096
          %419 = vsyncadd %s411, %s418
          %s420 = smul.addr %s415, 4
          %s421 = sadd.s32 %s416, %s420
          %s422 = smul.addr %s421, 128
          %s423 = scalar_lea.hbm %s0, %s422
          %s424 = sshll.u32 %s414, 4
          %s425 = int_to_ptr.vmem [resolvable:$true] %s424
          %430 = dma.hbm_to_vmem [thread:$0]  %s423, 4096, %s425, %s411, 512, 256, 16
        $region64: #{tpu_custom_call.1} parent=59 // pred_fallthru
          _
        // Predicated region
        $region65: #{tpu_custom_call.1} parent=59 // pred_check
          %p431 = pneg %p92
        $region66: #{tpu_custom_call.1} parent=59 // pred_check_branch
          %433 = sbr.rel (%p431) target = $region68
        $region67: #{tpu_custom_call.1} parent=59 // pred_region
          %s434 = sand.u32 %s82, 1
          %s435 = scalar_lea.sflag [#allocation9], %s434
          %s436 = sand.u32 %s82, 1
          %s437 = smul.addr %s436, 256
          %s438 = scalar_lea.vmem [#allocation8], %s437
          %s439 = smul.u32 16, %s37
          %s440 = smul.u32 2, %s38
          %s442 = ssub.s32 4096, 4096
          %443 = vsyncadd %s435, %s442
          %s444 = smul.addr %s439, 4
          %s445 = sadd.s32 %s440, %s444
          %s446 = smul.addr %s445, 128
          %s447 = scalar_lea.hbm %s1, %s446
          %s448 = sshll.u32 %s438, 4
          %s449 = int_to_ptr.vmem [resolvable:$true] %s448
          %454 = dma.hbm_to_vmem [thread:$0]  %s447, 4096, %s449, %s435, 512, 256, 16
        $region68: #{tpu_custom_call.1} parent=59 // pred_fallthru
          _
      $region60: #{tpu_custom_call.1} parent=5 // pred_fallthru
        _
      %p455 = scmp.le.s32.totalorder 1, %s30
      %p456 = scmp.lt.s32.totalorder %s30, 5
      %p457 = pnand %p455, %p456
      %p458 = pneg %p457
      // Predicated region
      $region69: #{tpu_custom_call.1} parent=5 // pred_check
        _
      $region70: #{tpu_custom_call.1} parent=5 // pred_check_branch
        %460 = sbr.rel (%p457) target = $region72
      $region71: #{tpu_custom_call.1} parent=5 // pred_region
        %s461 = ssub.s32 %s30, 1
        %s462 = sand.u32 %s57, 1
        %s463 = scalar_lea.sflag [#allocation6], %s462
        %s464 = sand.u32 %s57, 1
        %s465 = smul.addr %s464, 256
        %s466 = scalar_lea.vmem [#allocation5], %s465
        // Predicated region
        $region73: #{tpu_custom_call.1} parent=71 // pred_check
          %p467 = pneg %p70
        $region74: #{tpu_custom_call.1} parent=71 // pred_check_branch
          %469 = sbr.rel (%p467) target = $region76
        $region75: #{tpu_custom_call.1} parent=71 // pred_region
          %470 = dma.done %s463, 4096
        $region76: #{tpu_custom_call.1} parent=71 // pred_fallthru
          _
        %s471 = sand.u32 %s85, 1
        %s472 = scalar_lea.sflag [#allocation9], %s471
        %s473 = sand.u32 %s85, 1
        %s474 = smul.addr %s473, 256
        %s475 = scalar_lea.vmem [#allocation8], %s474
        // Predicated region
        $region77: #{tpu_custom_call.1} parent=71 // pred_check
          %p476 = pneg %p98
        $region78: #{tpu_custom_call.1} parent=71 // pred_check_branch
          %478 = sbr.rel (%p476) target = $region80
        $region79: #{tpu_custom_call.1} parent=71 // pred_region
          %479 = dma.done %s472, 4096
        $region80: #{tpu_custom_call.1} parent=71 // pred_fallthru
          _
        %s480 = sand.u32 %s57, 1
        %s481 = scalar_lea.sflag [#allocation6], %s480
        %s482 = sand.u32 %s57, 1
        %s483 = smul.addr %s482, 256
        %s484 = scalar_lea.vmem [#allocation5], %s483
        %p485 = pneg %p70
        %p486 = pneg %p67
        %s487 = sand.u32 %s85, 1
        %s488 = scalar_lea.sflag [#allocation9], %s487
        %s489 = sand.u32 %s85, 1
        %s490 = smul.addr %s489, 256
        %s491 = scalar_lea.vmem [#allocation8], %s490
        %p492 = pneg %p98
        %p493 = pneg %p95
        %p494 = pneg %p119
        %p495 = pneg %p116
        %p496 = pneg %p140
        %p497 = pneg %p137
        %p498 = pneg %p161
        %p499 = pneg %p158
        %p500 = pneg %p182
        %p501 = pneg %p179
        %p502 = pneg %p203
        %p503 = pneg %p200
        %p504 = pneg %p224
        %p505 = pneg %p221
        %p506 = pneg %p245
        %p507 = pneg %p242
        %p508 = pneg %p266
        %p509 = pneg %p263
        %p510 = pneg %p287
        %p511 = pneg %p284
        %p512 = pneg %p308
        %p513 = pneg %p305
        %p514 = pneg %p329
        %p515 = pneg %p326
        %p516 = pneg %p355
        %p517 = pneg %p352
        %s518 = sand.u32 %s342, 1
        %s519 = scalar_lea.sflag [#allocation7], %s518
        %s520 = sand.u32 %s342, 1
        %s521 = scalar_lea.vmem [#allocation10], %s520
        %s522 = smul.u32 16, %s39
        %s523 = smul.u32 2, %s40
        %s524 = smul.u32 16, %s39
        %s525 = smul.u32 2, %s40
        %p527 = scmp.eq.s32.totalorder %s40, 0
        // Predicated region
        $region81: #{tpu_custom_call.1} parent=71 // pred_check
          %p528 = pneg %p527
        $region82: #{tpu_custom_call.1} parent=71 // pred_check_branch
          %530 = sbr.rel (%p528) target = $region84
        $region83: #{tpu_custom_call.1} parent=71 // pred_region
          %vm531 = vcmask 261120
          %532 = vst.msk [vmem:[#allocation2] sm:$0xff] %vm531, 0.0
          %533 = vst.msk [vmem:[#allocation2 + $0x8] sm:$0xff] %vm531, 0.0
          %534 = vst.msk [vmem:[#allocation2 + $0x10] sm:$0xff] %vm531, 0.0
          %535 = vst.msk [vmem:[#allocation2 + $0x18] sm:$0xff] %vm531, 0.0
          %536 = vst.msk [vmem:[#allocation2 + $0x20] sm:$0xff] %vm531, 0.0
          %537 = vst.msk [vmem:[#allocation2 + $0x28] sm:$0xff] %vm531, 0.0
          %538 = vst.msk [vmem:[#allocation2 + $0x30] sm:$0xff] %vm531, 0.0
          %539 = vst.msk [vmem:[#allocation2 + $0x38] sm:$0xff] %vm531, 0.0
          %540 = vst.msk [vmem:[#allocation2 + $0x40] sm:$0xff] %vm531, 0.0
          %541 = vst.msk [vmem:[#allocation2 + $0x48] sm:$0xff] %vm531, 0.0
          %542 = vst.msk [vmem:[#allocation2 + $0x50] sm:$0xff] %vm531, 0.0
          %543 = vst.msk [vmem:[#allocation2 + $0x58] sm:$0xff] %vm531, 0.0
          %544 = vst.msk [vmem:[#allocation2 + $0x60] sm:$0xff] %vm531, 0.0
          %545 = vst.msk [vmem:[#allocation2 + $0x68] sm:$0xff] %vm531, 0.0
          %546 = vst.msk [vmem:[#allocation2 + $0x70] sm:$0xff] %vm531, 0.0
          %547 = vst.msk [vmem:[#allocation2 + $0x78] sm:$0xff] %vm531, 0.0
          %548 = vst.msk [vmem:[#allocation3] sm:$0xff] %vm531, 0.0
          %549 = vst.msk [vmem:[#allocation3 + $0x8] sm:$0xff] %vm531, 0.0
          %550 = vst.msk [vmem:[#allocation3 + $0x10] sm:$0xff] %vm531, 0.0
          %551 = vst.msk [vmem:[#allocation3 + $0x18] sm:$0xff] %vm531, 0.0
          %552 = vst.msk [vmem:[#allocation3 + $0x20] sm:$0xff] %vm531, 0.0
          %553 = vst.msk [vmem:[#allocation3 + $0x28] sm:$0xff] %vm531, 0.0
          %554 = vst.msk [vmem:[#allocation3 + $0x30] sm:$0xff] %vm531, 0.0
          %555 = vst.msk [vmem:[#allocation3 + $0x38] sm:$0xff] %vm531, 0.0
          %556 = vst.msk [vmem:[#allocation3 + $0x40] sm:$0xff] %vm531, 0.0
          %557 = vst.msk [vmem:[#allocation3 + $0x48] sm:$0xff] %vm531, 0.0
          %558 = vst.msk [vmem:[#allocation3 + $0x50] sm:$0xff] %vm531, 0.0
          %559 = vst.msk [vmem:[#allocation3 + $0x58] sm:$0xff] %vm531, 0.0
          %560 = vst.msk [vmem:[#allocation3 + $0x60] sm:$0xff] %vm531, 0.0
          %561 = vst.msk [vmem:[#allocation3 + $0x68] sm:$0xff] %vm531, 0.0
          %562 = vst.msk [vmem:[#allocation3 + $0x70] sm:$0xff] %vm531, 0.0
          %563 = vst.msk [vmem:[#allocation3 + $0x78] sm:$0xff] %vm531, 0.0
        $region84: #{tpu_custom_call.1} parent=71 // pred_fallthru
          _
        %s564 = smul.u32 %s40, 256
        %s565 = sshra.s32 %s564, 3
        %s566 = sand.u32 %s564, 7
        %s567 = smul.addr %s565, 4
        %s568 = scalar_lea.vmem %s2, %s567
        %v569 = vld [vmem:[%s568] sm:$0xf]
        %v570 = vld [vmem:[%s568 + $0x4] sm:$0xf]
        %v571 = vld [vmem:[%s568 + $0x8] sm:$0xf]
        %v572 = vld [vmem:[%s568 + $0xc] sm:$0xf]
        %v573 = vld [vmem:[%s568 + $0x10] sm:$0xf]
        %v574 = vld [vmem:[%s568 + $0x14] sm:$0xf]
        %v575 = vld [vmem:[%s568 + $0x18] sm:$0xf]
        %v576 = vld [vmem:[%s568 + $0x1c] sm:$0xf]
        %v577 = vld [vmem:[%s568 + $0x20] sm:$0xf]
        %v578 = vld [vmem:[%s568 + $0x24] sm:$0xf]
        %v579 = vld [vmem:[%s568 + $0x28] sm:$0xf]
        %v580 = vld [vmem:[%s568 + $0x2c] sm:$0xf]
        %v581 = vld [vmem:[%s568 + $0x30] sm:$0xf]
        %v582 = vld [vmem:[%s568 + $0x34] sm:$0xf]
        %v583 = vld [vmem:[%s568 + $0x38] sm:$0xf]
        %v584 = vld [vmem:[%s568 + $0x3c] sm:$0xf]
        %v585 = vld [vmem:[%s568 + $0x40] sm:$0xf]
        %v586 = vld [vmem:[%s568 + $0x44] sm:$0xf]
        %v587 = vld [vmem:[%s568 + $0x48] sm:$0xf]
        %v588 = vld [vmem:[%s568 + $0x4c] sm:$0xf]
        %v589 = vld [vmem:[%s568 + $0x50] sm:$0xf]
        %v590 = vld [vmem:[%s568 + $0x54] sm:$0xf]
        %v591 = vld [vmem:[%s568 + $0x58] sm:$0xf]
        %v592 = vld [vmem:[%s568 + $0x5c] sm:$0xf]
        %v593 = vld [vmem:[%s568 + $0x60] sm:$0xf]
        %v594 = vld [vmem:[%s568 + $0x64] sm:$0xf]
        %v595 = vld [vmem:[%s568 + $0x68] sm:$0xf]
        %v596 = vld [vmem:[%s568 + $0x6c] sm:$0xf]
        %v597 = vld [vmem:[%s568 + $0x70] sm:$0xf]
        %v598 = vld [vmem:[%s568 + $0x74] sm:$0xf]
        %v599 = vld [vmem:[%s568 + $0x78] sm:$0xf]
        %v600 = vld [vmem:[%s568 + $0x7c] sm:$0xf]
        %v601 = vld [vmem:[#allocation2] sm:$0xff]
        %v602 = vld [vmem:[#allocation2 + $0x8] sm:$0xff]
        %v603 = vld [vmem:[#allocation2 + $0x10] sm:$0xff]
        %v604 = vld [vmem:[#allocation2 + $0x18] sm:$0xff]
        %v605 = vld [vmem:[#allocation2 + $0x20] sm:$0xff]
        %v606 = vld [vmem:[#allocation2 + $0x28] sm:$0xff]
        %v607 = vld [vmem:[#allocation2 + $0x30] sm:$0xff]
        %v608 = vld [vmem:[#allocation2 + $0x38] sm:$0xff]
        %v609 = vld [vmem:[#allocation2 + $0x40] sm:$0xff]
        %v610 = vld [vmem:[#allocation2 + $0x48] sm:$0xff]
        %v611 = vld [vmem:[#allocation2 + $0x50] sm:$0xff]
        %v612 = vld [vmem:[#allocation2 + $0x58] sm:$0xff]
        %v613 = vld [vmem:[#allocation2 + $0x60] sm:$0xff]
        %v614 = vld [vmem:[#allocation2 + $0x68] sm:$0xff]
        %v615 = vld [vmem:[#allocation2 + $0x70] sm:$0xff]
        %v616 = vld [vmem:[#allocation2 + $0x78] sm:$0xff]
        %v617 = vld [vmem:[%s466] sm:$0xff]
        %v618 = vld [vmem:[%s466 + $0x8] sm:$0xff]
        %v619 = vld [vmem:[%s466 + $0x10] sm:$0xff]
        %v620 = vld [vmem:[%s466 + $0x18] sm:$0xff]
        %v621 = vld [vmem:[%s466 + $0x20] sm:$0xff]
        %v622 = vld [vmem:[%s466 + $0x28] sm:$0xff]
        %v623 = vld [vmem:[%s466 + $0x30] sm:$0xff]
        %v624 = vld [vmem:[%s466 + $0x38] sm:$0xff]
        %v625 = vld [vmem:[%s466 + $0x40] sm:$0xff]
        %v626 = vld [vmem:[%s466 + $0x48] sm:$0xff]
        %v627 = vld [vmem:[%s466 + $0x50] sm:$0xff]
        %v628 = vld [vmem:[%s466 + $0x58] sm:$0xff]
        %v629 = vld [vmem:[%s466 + $0x60] sm:$0xff]
        %v630 = vld [vmem:[%s466 + $0x68] sm:$0xff]
        %v631 = vld [vmem:[%s466 + $0x70] sm:$0xff]
        %v632 = vld [vmem:[%s466 + $0x78] sm:$0xff]
        %v633 = vld [vmem:[%s466 + $0x80] sm:$0xff]
        %v634 = vld [vmem:[%s466 + $0x88] sm:$0xff]
        %v635 = vld [vmem:[%s466 + $0x90] sm:$0xff]
        %v636 = vld [vmem:[%s466 + $0x98] sm:$0xff]
        %v637 = vld [vmem:[%s466 + $0xa0] sm:$0xff]
        %v638 = vld [vmem:[%s466 + $0xa8] sm:$0xff]
        %v639 = vld [vmem:[%s466 + $0xb0] sm:$0xff]
        %v640 = vld [vmem:[%s466 + $0xb8] sm:$0xff]
        %v641 = vld [vmem:[%s466 + $0xc0] sm:$0xff]
        %v642 = vld [vmem:[%s466 + $0xc8] sm:$0xff]
        %v643 = vld [vmem:[%s466 + $0xd0] sm:$0xff]
        %v644 = vld [vmem:[%s466 + $0xd8] sm:$0xff]
        %v645 = vld [vmem:[%s466 + $0xe0] sm:$0xff]
        %v646 = vld [vmem:[%s466 + $0xe8] sm:$0xff]
        %v647 = vld [vmem:[%s466 + $0xf0] sm:$0xff]
        %v648 = vld [vmem:[%s466 + $0xf8] sm:$0xff]
        %v649 = vpack.c.bf16 %v619, %v617
        %v650 = vpack.c.bf16 %v620, %v618
        %v651 = vpack.c.bf16 %v623, %v621
        %v652 = vpack.c.bf16 %v624, %v622
        %v653 = vpack.c.bf16 %v627, %v625
        %v654 = vpack.c.bf16 %v628, %v626
        %v655 = vpack.c.bf16 %v631, %v629
        %v656 = vpack.c.bf16 %v632, %v630
        %v657 = vpack.c.bf16 %v635, %v633
        %v658 = vpack.c.bf16 %v636, %v634
        %v659 = vpack.c.bf16 %v639, %v637
        %v660 = vpack.c.bf16 %v640, %v638
        %v661 = vpack.c.bf16 %v643, %v641
        %v662 = vpack.c.bf16 %v644, %v642
        %v663 = vpack.c.bf16 %v647, %v645
        %v664 = vpack.c.bf16 %v648, %v646
        %v697 = vunpack.c.l.b16 %v569
        %v698 = vunpack.c.l.b16 %v570
        %v699 = vunpack.c.l.b16 %v571
        %v700 = vunpack.c.l.b16 %v572
        %v701 = vunpack.c.l.b16 %v573
        %v702 = vunpack.c.l.b16 %v574
        %v703 = vunpack.c.l.b16 %v575
        %v704 = vunpack.c.l.b16 %v576
        %v705 = vunpack.c.l.b16 %v577
        %v706 = vunpack.c.l.b16 %v578
        %v707 = vunpack.c.l.b16 %v579
        %v708 = vunpack.c.l.b16 %v580
        %v709 = vunpack.c.l.b16 %v581
        %v710 = vunpack.c.l.b16 %v582
        %v711 = vunpack.c.l.b16 %v583
        %v712 = vunpack.c.l.b16 %v584
        %v713 = vunpack.c.l.b16 %v585
        %v714 = vunpack.c.l.b16 %v586
        %v715 = vunpack.c.l.b16 %v587
        %v716 = vunpack.c.l.b16 %v588
        %v717 = vunpack.c.l.b16 %v589
        %v718 = vunpack.c.l.b16 %v590
        %v719 = vunpack.c.l.b16 %v591
        %v720 = vunpack.c.l.b16 %v592
        %v721 = vunpack.c.l.b16 %v593
        %v722 = vunpack.c.l.b16 %v594
        %v723 = vunpack.c.l.b16 %v595
        %v724 = vunpack.c.l.b16 %v596
        %v725 = vunpack.c.l.b16 %v597
        %v726 = vunpack.c.l.b16 %v598
        %v727 = vunpack.c.l.b16 %v599
        %v728 = vunpack.c.l.b16 %v600
        %v729 = vpack.c.b16 %v698, %v697
        %v730 = vpack.c.b16 %v700, %v699
        %v731 = vpack.c.b16 %v702, %v701
        %v732 = vpack.c.b16 %v704, %v703
        %v733 = vpack.c.b16 %v706, %v705
        %v734 = vpack.c.b16 %v708, %v707
        %v735 = vpack.c.b16 %v710, %v709
        %v736 = vpack.c.b16 %v712, %v711
        %v737 = vpack.c.b16 %v714, %v713
        %v738 = vpack.c.b16 %v716, %v715
        %v739 = vpack.c.b16 %v718, %v717
        %v740 = vpack.c.b16 %v720, %v719
        %v741 = vpack.c.b16 %v722, %v721
        %v742 = vpack.c.b16 %v724, %v723
        %v743 = vpack.c.b16 %v726, %v725
        %v744 = vpack.c.b16 %v728, %v727
        %761 = vmatprep.subr.bf16.mxu0 0
        %762 = vmatpush1.bf16.msra.mxu0 %v736
        %763 = vmatprep.subr.bf16.mxu0 0
        %764 = vmatpush1.bf16.msra.mxu0 %v735
        %765 = vmatprep.subr.bf16.mxu0 0
        %766 = vmatpush1.bf16.msra.mxu0 %v734
        %767 = vmatprep.subr.bf16.mxu0 0
        %768 = vmatpush1.bf16.msra.mxu0 %v733
        %769 = vmatprep.subr.bf16.mxu0 0
        %770 = vmatpush1.bf16.msra.mxu0 %v732
        %771 = vmatprep.subr.bf16.mxu0 0
        %772 = vmatpush1.bf16.msra.mxu0 %v731
        %773 = vmatprep.subr.bf16.mxu0 0
        %774 = vmatpush1.bf16.msra.mxu0 %v730
        %775 = vmatprep.subr.bf16.mxu0 0
        %776 = vmatpush1.bf16.msra.mxu0 %v729
        %777 = vmatprep.subr.bf16.mxu0 0
        %778 = vmatpush2.bf16.msra.mxu0 %v744
        %779 = vmatprep.subr.bf16.mxu0 0
        %780 = vmatpush2.bf16.msra.mxu0 %v743
        %781 = vmatprep.subr.bf16.mxu0 0
        %782 = vmatpush2.bf16.msra.mxu0 %v742
        %783 = vmatprep.subr.bf16.mxu0 0
        %784 = vmatpush2.bf16.msra.mxu0 %v741
        %785 = vmatprep.subr.bf16.mxu0 0
        %786 = vmatpush2.bf16.msra.mxu0 %v740
        %787 = vmatprep.subr.bf16.mxu0 0
        %788 = vmatpush2.bf16.msra.mxu0 %v739
        %789 = vmatprep.subr.bf16.mxu0 0
        %790 = vmatpush2.bf16.msra.mxu0 %v738
        %791 = vmatprep.subr.bf16.mxu0 0
        %792 = vmatpush2.bf16.msra.mxu0 %v737
        %793 = vmatprep.mubr.bf16.mxu0 %v650
        %794 = vmatmul.mubr.bf16.gmra.mxu0 %v649
        %v795 = vpop.f32.mrf.mxu0
        %v796 = vadd.f32 0.0, %v795
        %v797 = vpop.f32.mrf.mxu0
        %v798 = vpop.f32.mrf.mxu0
        %v799 = vadd.f32 0.0, %v798
        %v800 = vpop.f32.mrf.mxu0
        %801 = vmatprep.mubr.bf16.mxu0 %v652
        %802 = vmatmul.mubr.bf16.gmra.mxu0 %v651
        %v803 = vpop.f32.mrf.mxu0
        %v804 = vadd.f32 0.0, %v803
        %v805 = vpop.f32.mrf.mxu0
        %v806 = vpop.f32.mrf.mxu0
        %v807 = vadd.f32 0.0, %v806
        %v808 = vpop.f32.mrf.mxu0
        %809 = vmatprep.mubr.bf16.mxu0 %v654
        %810 = vmatmul.mubr.bf16.gmra.mxu0 %v653
        %v811 = vpop.f32.mrf.mxu0
        %v812 = vadd.f32 0.0, %v811
        %v813 = vpop.f32.mrf.mxu0
        %v814 = vpop.f32.mrf.mxu0
        %v815 = vadd.f32 0.0, %v814
        %v816 = vpop.f32.mrf.mxu0
        %817 = vmatprep.mubr.bf16.mxu0 %v656
        %818 = vmatmul.mubr.bf16.gmra.mxu0 %v655
        %v819 = vpop.f32.mrf.mxu0
        %v820 = vadd.f32 0.0, %v819
        %v821 = vpop.f32.mrf.mxu0
        %v822 = vpop.f32.mrf.mxu0
        %v823 = vadd.f32 0.0, %v822
        %v824 = vpop.f32.mrf.mxu0
        %825 = vmatprep.mubr.bf16.mxu0 %v658
        %826 = vmatmul.mubr.bf16.gmra.mxu0 %v657
        %v827 = vpop.f32.mrf.mxu0
        %v828 = vadd.f32 0.0, %v827
        %v829 = vpop.f32.mrf.mxu0
        %v830 = vpop.f32.mrf.mxu0
        %v831 = vadd.f32 0.0, %v830
        %v832 = vpop.f32.mrf.mxu0
        %833 = vmatprep.mubr.bf16.mxu0 %v660
        %834 = vmatmul.mubr.bf16.gmra.mxu0 %v659
        %v835 = vpop.f32.mrf.mxu0
        %v836 = vadd.f32 0.0, %v835
        %v837 = vpop.f32.mrf.mxu0
        %v838 = vpop.f32.mrf.mxu0
        %v839 = vadd.f32 0.0, %v838
        %v840 = vpop.f32.mrf.mxu0
        %841 = vmatprep.mubr.bf16.mxu0 %v662
        %842 = vmatmul.mubr.bf16.gmra.mxu0 %v661
        %v843 = vpop.f32.mrf.mxu0
        %v844 = vadd.f32 0.0, %v843
        %v845 = vpop.f32.mrf.mxu0
        %v846 = vpop.f32.mrf.mxu0
        %v847 = vadd.f32 0.0, %v846
        %v848 = vpop.f32.mrf.mxu0
        %849 = vmatprep.mubr.bf16.mxu0 %v664
        %850 = vmatmul.mubr.bf16.gmra.mxu0 %v663
        %v851 = vpop.f32.mrf.mxu0
        %v852 = vadd.f32 0.0, %v851
        %v853 = vpop.f32.mrf.mxu0
        %v854 = vpop.f32.mrf.mxu0
        %v855 = vadd.f32 0.0, %v854
        %v856 = vpop.f32.mrf.mxu0
        %857 = vdwg.mxu0
        %v858 = vadd.f32 %v601, %v796
        %v859 = vadd.f32 %v602, %v799
        %v860 = vadd.f32 %v603, %v804
        %v861 = vadd.f32 %v604, %v807
        %v862 = vadd.f32 %v605, %v812
        %v863 = vadd.f32 %v606, %v815
        %v864 = vadd.f32 %v607, %v820
        %v865 = vadd.f32 %v608, %v823
        %v866 = vadd.f32 %v609, %v828
        %v867 = vadd.f32 %v610, %v831
        %v868 = vadd.f32 %v611, %v836
        %v869 = vadd.f32 %v612, %v839
        %v870 = vadd.f32 %v613, %v844
        %v871 = vadd.f32 %v614, %v847
        %v872 = vadd.f32 %v615, %v852
        %v873 = vadd.f32 %v616, %v855
        %vm874 = vcmask 261120
        %875 = vst.msk [vmem:[#allocation2] sm:$0xff] %vm874, %v858
        %876 = vst.msk [vmem:[#allocation2 + $0x8] sm:$0xff] %vm874, %v859
        %877 = vst.msk [vmem:[#allocation2 + $0x10] sm:$0xff] %vm874, %v860
        %878 = vst.msk [vmem:[#allocation2 + $0x18] sm:$0xff] %vm874, %v861
        %879 = vst.msk [vmem:[#allocation2 + $0x20] sm:$0xff] %vm874, %v862
        %880 = vst.msk [vmem:[#allocation2 + $0x28] sm:$0xff] %vm874, %v863
        %881 = vst.msk [vmem:[#allocation2 + $0x30] sm:$0xff] %vm874, %v864
        %882 = vst.msk [vmem:[#allocation2 + $0x38] sm:$0xff] %vm874, %v865
        %883 = vst.msk [vmem:[#allocation2 + $0x40] sm:$0xff] %vm874, %v866
        %884 = vst.msk [vmem:[#allocation2 + $0x48] sm:$0xff] %vm874, %v867
        %885 = vst.msk [vmem:[#allocation2 + $0x50] sm:$0xff] %vm874, %v868
        %886 = vst.msk [vmem:[#allocation2 + $0x58] sm:$0xff] %vm874, %v869
        %887 = vst.msk [vmem:[#allocation2 + $0x60] sm:$0xff] %vm874, %v870
        %888 = vst.msk [vmem:[#allocation2 + $0x68] sm:$0xff] %vm874, %v871
        %889 = vst.msk [vmem:[#allocation2 + $0x70] sm:$0xff] %vm874, %v872
        %890 = vst.msk [vmem:[#allocation2 + $0x78] sm:$0xff] %vm874, %v873
        %v891 = vld [vmem:[#allocation3] sm:$0xff]
        %v892 = vld [vmem:[#allocation3 + $0x8] sm:$0xff]
        %v893 = vld [vmem:[#allocation3 + $0x10] sm:$0xff]
        %v894 = vld [vmem:[#allocation3 + $0x18] sm:$0xff]
        %v895 = vld [vmem:[#allocation3 + $0x20] sm:$0xff]
        %v896 = vld [vmem:[#allocation3 + $0x28] sm:$0xff]
        %v897 = vld [vmem:[#allocation3 + $0x30] sm:$0xff]
        %v898 = vld [vmem:[#allocation3 + $0x38] sm:$0xff]
        %v899 = vld [vmem:[#allocation3 + $0x40] sm:$0xff]
        %v900 = vld [vmem:[#allocation3 + $0x48] sm:$0xff]
        %v901 = vld [vmem:[#allocation3 + $0x50] sm:$0xff]
        %v902 = vld [vmem:[#allocation3 + $0x58] sm:$0xff]
        %v903 = vld [vmem:[#allocation3 + $0x60] sm:$0xff]
        %v904 = vld [vmem:[#allocation3 + $0x68] sm:$0xff]
        %v905 = vld [vmem:[#allocation3 + $0x70] sm:$0xff]
        %v906 = vld [vmem:[#allocation3 + $0x78] sm:$0xff]
        %v907 = vld [vmem:[%s475] sm:$0xff]
        %v908 = vld [vmem:[%s475 + $0x8] sm:$0xff]
        %v909 = vld [vmem:[%s475 + $0x10] sm:$0xff]
        %v910 = vld [vmem:[%s475 + $0x18] sm:$0xff]
        %v911 = vld [vmem:[%s475 + $0x20] sm:$0xff]
        %v912 = vld [vmem:[%s475 + $0x28] sm:$0xff]
        %v913 = vld [vmem:[%s475 + $0x30] sm:$0xff]
        %v914 = vld [vmem:[%s475 + $0x38] sm:$0xff]
        %v915 = vld [vmem:[%s475 + $0x40] sm:$0xff]
        %v916 = vld [vmem:[%s475 + $0x48] sm:$0xff]
        %v917 = vld [vmem:[%s475 + $0x50] sm:$0xff]
        %v918 = vld [vmem:[%s475 + $0x58] sm:$0xff]
        %v919 = vld [vmem:[%s475 + $0x60] sm:$0xff]
        %v920 = vld [vmem:[%s475 + $0x68] sm:$0xff]
        %v921 = vld [vmem:[%s475 + $0x70] sm:$0xff]
        %v922 = vld [vmem:[%s475 + $0x78] sm:$0xff]
        %v923 = vld [vmem:[%s475 + $0x80] sm:$0xff]
        %v924 = vld [vmem:[%s475 + $0x88] sm:$0xff]
        %v925 = vld [vmem:[%s475 + $0x90] sm:$0xff]
        %v926 = vld [vmem:[%s475 + $0x98] sm:$0xff]
        %v927 = vld [vmem:[%s475 + $0xa0] sm:$0xff]
        %v928 = vld [vmem:[%s475 + $0xa8] sm:$0xff]
        %v929 = vld [vmem:[%s475 + $0xb0] sm:$0xff]
        %v930 = vld [vmem:[%s475 + $0xb8] sm:$0xff]
        %v931 = vld [vmem:[%s475 + $0xc0] sm:$0xff]
        %v932 = vld [vmem:[%s475 + $0xc8] sm:$0xff]
        %v933 = vld [vmem:[%s475 + $0xd0] sm:$0xff]
        %v934 = vld [vmem:[%s475 + $0xd8] sm:$0xff]
        %v935 = vld [vmem:[%s475 + $0xe0] sm:$0xff]
        %v936 = vld [vmem:[%s475 + $0xe8] sm:$0xff]
        %v937 = vld [vmem:[%s475 + $0xf0] sm:$0xff]
        %v938 = vld [vmem:[%s475 + $0xf8] sm:$0xff]
        %v939 = vpack.c.bf16 %v909, %v907
        %v940 = vpack.c.bf16 %v910, %v908
        %v941 = vpack.c.bf16 %v913, %v911
        %v942 = vpack.c.bf16 %v914, %v912
        %v943 = vpack.c.bf16 %v917, %v915
        %v944 = vpack.c.bf16 %v918, %v916
        %v945 = vpack.c.bf16 %v921, %v919
        %v946 = vpack.c.bf16 %v922, %v920
        %v947 = vpack.c.bf16 %v925, %v923
        %v948 = vpack.c.bf16 %v926, %v924
        %v949 = vpack.c.bf16 %v929, %v927
        %v950 = vpack.c.bf16 %v930, %v928
        %v951 = vpack.c.bf16 %v933, %v931
        %v952 = vpack.c.bf16 %v934, %v932
        %v953 = vpack.c.bf16 %v937, %v935
        %v954 = vpack.c.bf16 %v938, %v936
        %955 = vmatprep.subr.bf16.mxu0 0
        %956 = vmatpush1.bf16.msra.mxu0 %v736
        %957 = vmatprep.subr.bf16.mxu0 0
        %958 = vmatpush1.bf16.msra.mxu0 %v735
        %959 = vmatprep.subr.bf16.mxu0 0
        %960 = vmatpush1.bf16.msra.mxu0 %v734
        %961 = vmatprep.subr.bf16.mxu0 0
        %962 = vmatpush1.bf16.msra.mxu0 %v733
        %963 = vmatprep.subr.bf16.mxu0 0
        %964 = vmatpush1.bf16.msra.mxu0 %v732
        %965 = vmatprep.subr.bf16.mxu0 0
        %966 = vmatpush1.bf16.msra.mxu0 %v731
        %967 = vmatprep.subr.bf16.mxu0 0
        %968 = vmatpush1.bf16.msra.mxu0 %v730
        %969 = vmatprep.subr.bf16.mxu0 0
        %970 = vmatpush1.bf16.msra.mxu0 %v729
        %971 = vmatprep.subr.bf16.mxu0 0
        %972 = vmatpush2.bf16.msra.mxu0 %v744
        %973 = vmatprep.subr.bf16.mxu0 0
        %974 = vmatpush2.bf16.msra.mxu0 %v743
        %975 = vmatprep.subr.bf16.mxu0 0
        %976 = vmatpush2.bf16.msra.mxu0 %v742
        %977 = vmatprep.subr.bf16.mxu0 0
        %978 = vmatpush2.bf16.msra.mxu0 %v741
        %979 = vmatprep.subr.bf16.mxu0 0
        %980 = vmatpush2.bf16.msra.mxu0 %v740
        %981 = vmatprep.subr.bf16.mxu0 0
        %982 = vmatpush2.bf16.msra.mxu0 %v739
        %983 = vmatprep.subr.bf16.mxu0 0
        %984 = vmatpush2.bf16.msra.mxu0 %v738
        %985 = vmatprep.subr.bf16.mxu0 0
        %986 = vmatpush2.bf16.msra.mxu0 %v737
        %987 = vmatprep.mubr.bf16.mxu0 %v940
        %988 = vmatmul.mubr.bf16.gmra.mxu0 %v939
        %v989 = vpop.f32.mrf.mxu0
        %v990 = vadd.f32 0.0, %v989
        %v991 = vpop.f32.mrf.mxu0
        %v992 = vpop.f32.mrf.mxu0
        %v993 = vadd.f32 0.0, %v992
        %v994 = vpop.f32.mrf.mxu0
        %995 = vmatprep.mubr.bf16.mxu0 %v942
        %996 = vmatmul.mubr.bf16.gmra.mxu0 %v941
        %v997 = vpop.f32.mrf.mxu0
        %v998 = vadd.f32 0.0, %v997
        %v999 = vpop.f32.mrf.mxu0
        %v1000 = vpop.f32.mrf.mxu0
        %v1001 = vadd.f32 0.0, %v1000
        %v1002 = vpop.f32.mrf.mxu0
        %1003 = vmatprep.mubr.bf16.mxu0 %v944
        %1004 = vmatmul.mubr.bf16.gmra.mxu0 %v943
        %v1005 = vpop.f32.mrf.mxu0
        %v1006 = vadd.f32 0.0, %v1005
        %v1007 = vpop.f32.mrf.mxu0
        %v1008 = vpop.f32.mrf.mxu0
        %v1009 = vadd.f32 0.0, %v1008
        %v1010 = vpop.f32.mrf.mxu0
        %1011 = vmatprep.mubr.bf16.mxu0 %v946
        %1012 = vmatmul.mubr.bf16.gmra.mxu0 %v945
        %v1013 = vpop.f32.mrf.mxu0
        %v1014 = vadd.f32 0.0, %v1013
        %v1015 = vpop.f32.mrf.mxu0
        %v1016 = vpop.f32.mrf.mxu0
        %v1017 = vadd.f32 0.0, %v1016
        %v1018 = vpop.f32.mrf.mxu0
        %1019 = vmatprep.mubr.bf16.mxu0 %v948
        %1020 = vmatmul.mubr.bf16.gmra.mxu0 %v947
        %v1021 = vpop.f32.mrf.mxu0
        %v1022 = vadd.f32 0.0, %v1021
        %v1023 = vpop.f32.mrf.mxu0
        %v1024 = vpop.f32.mrf.mxu0
        %v1025 = vadd.f32 0.0, %v1024
        %v1026 = vpop.f32.mrf.mxu0
        %1027 = vmatprep.mubr.bf16.mxu0 %v950
        %1028 = vmatmul.mubr.bf16.gmra.mxu0 %v949
        %v1029 = vpop.f32.mrf.mxu0
        %v1030 = vadd.f32 0.0, %v1029
        %v1031 = vpop.f32.mrf.mxu0
        %v1032 = vpop.f32.mrf.mxu0
        %v1033 = vadd.f32 0.0, %v1032
        %v1034 = vpop.f32.mrf.mxu0
        %1035 = vmatprep.mubr.bf16.mxu0 %v952
        %1036 = vmatmul.mubr.bf16.gmra.mxu0 %v951
        %v1037 = vpop.f32.mrf.mxu0
        %v1038 = vadd.f32 0.0, %v1037
        %v1039 = vpop.f32.mrf.mxu0
        %v1040 = vpop.f32.mrf.mxu0
        %v1041 = vadd.f32 0.0, %v1040
        %v1042 = vpop.f32.mrf.mxu0
        %1043 = vmatprep.mubr.bf16.mxu0 %v954
        %1044 = vmatmul.mubr.bf16.gmra.mxu0 %v953
        %v1045 = vpop.f32.mrf.mxu0
        %v1046 = vadd.f32 0.0, %v1045
        %v1047 = vpop.f32.mrf.mxu0
        %v1048 = vpop.f32.mrf.mxu0
        %v1049 = vadd.f32 0.0, %v1048
        %v1050 = vpop.f32.mrf.mxu0
        %1051 = vdwg.mxu0
        %v1052 = vadd.f32 %v891, %v990
        %v1053 = vadd.f32 %v892, %v993
        %v1054 = vadd.f32 %v893, %v998
        %v1055 = vadd.f32 %v894, %v1001
        %v1056 = vadd.f32 %v895, %v1006
        %v1057 = vadd.f32 %v896, %v1009
        %v1058 = vadd.f32 %v897, %v1014
        %v1059 = vadd.f32 %v898, %v1017
        %v1060 = vadd.f32 %v899, %v1022
        %v1061 = vadd.f32 %v900, %v1025
        %v1062 = vadd.f32 %v901, %v1030
        %v1063 = vadd.f32 %v902, %v1033
        %v1064 = vadd.f32 %v903, %v1038
        %v1065 = vadd.f32 %v904, %v1041
        %v1066 = vadd.f32 %v905, %v1046
        %v1067 = vadd.f32 %v906, %v1049
        %1068 = vst.msk [vmem:[#allocation3] sm:$0xff] %vm874, %v1052
        %1069 = vst.msk [vmem:[#allocation3 + $0x8] sm:$0xff] %vm874, %v1053
        %1070 = vst.msk [vmem:[#allocation3 + $0x10] sm:$0xff] %vm874, %v1054
        %1071 = vst.msk [vmem:[#allocation3 + $0x18] sm:$0xff] %vm874, %v1055
        %1072 = vst.msk [vmem:[#allocation3 + $0x20] sm:$0xff] %vm874, %v1056
        %1073 = vst.msk [vmem:[#allocation3 + $0x28] sm:$0xff] %vm874, %v1057
        %1074 = vst.msk [vmem:[#allocation3 + $0x30] sm:$0xff] %vm874, %v1058
        %1075 = vst.msk [vmem:[#allocation3 + $0x38] sm:$0xff] %vm874, %v1059
        %1076 = vst.msk [vmem:[#allocation3 + $0x40] sm:$0xff] %vm874, %v1060
        %1077 = vst.msk [vmem:[#allocation3 + $0x48] sm:$0xff] %vm874, %v1061
        %1078 = vst.msk [vmem:[#allocation3 + $0x50] sm:$0xff] %vm874, %v1062
        %1079 = vst.msk [vmem:[#allocation3 + $0x58] sm:$0xff] %vm874, %v1063
        %1080 = vst.msk [vmem:[#allocation3 + $0x60] sm:$0xff] %vm874, %v1064
        %1081 = vst.msk [vmem:[#allocation3 + $0x68] sm:$0xff] %vm874, %v1065
        %1082 = vst.msk [vmem:[#allocation3 + $0x70] sm:$0xff] %vm874, %v1066
        %1083 = vst.msk [vmem:[#allocation3 + $0x78] sm:$0xff] %vm874, %v1067
        %p1084 = scmp.eq.s32.totalorder %s40, 1
        // Predicated region
        $region85: #{tpu_custom_call.1} parent=71 // pred_check
          %p1085 = pneg %p1084
        $region86: #{tpu_custom_call.1} parent=71 // pred_check_branch
          %1087 = sbr.rel (%p1085) target = $region88
        $region87: #{tpu_custom_call.1} parent=71 // pred_region
          %v1088 = vld [vmem:[#allocation2] sm:$0xff]
          %v1089 = vld [vmem:[#allocation2 + $0x8] sm:$0xff]
          %v1090 = vld [vmem:[#allocation2 + $0x10] sm:$0xff]
          %v1091 = vld [vmem:[#allocation2 + $0x18] sm:$0xff]
          %v1092 = vld [vmem:[#allocation2 + $0x20] sm:$0xff]
          %v1093 = vld [vmem:[#allocation2 + $0x28] sm:$0xff]
          %v1094 = vld [vmem:[#allocation2 + $0x30] sm:$0xff]
          %v1095 = vld [vmem:[#allocation2 + $0x38] sm:$0xff]
          %v1096 = vld [vmem:[#allocation2 + $0x40] sm:$0xff]
          %v1097 = vld [vmem:[#allocation2 + $0x48] sm:$0xff]
          %v1098 = vld [vmem:[#allocation2 + $0x50] sm:$0xff]
          %v1099 = vld [vmem:[#allocation2 + $0x58] sm:$0xff]
          %v1100 = vld [vmem:[#allocation2 + $0x60] sm:$0xff]
          %v1101 = vld [vmem:[#allocation2 + $0x68] sm:$0xff]
          %v1102 = vld [vmem:[#allocation2 + $0x70] sm:$0xff]
          %v1103 = vld [vmem:[#allocation2 + $0x78] sm:$0xff]
          %v1104 = vld [vmem:[%s3] sm:$0x1]
          %v1106 = vlaneseq
          %v1107 = vshrl.u32 %v1106, 7
          %v1108 = vsub.s32 0, %v1107
          %v1109 = vrot.slane %v1104, %v1108
          %v1111 = vadd.f32 %v1088, %v1109
          %v1112 = vadd.f32 %v1089, %v1109
          %v1113 = vadd.f32 %v1090, %v1109
          %v1114 = vadd.f32 %v1091, %v1109
          %v1115 = vadd.f32 %v1092, %v1109
          %v1116 = vadd.f32 %v1093, %v1109
          %v1117 = vadd.f32 %v1094, %v1109
          %v1118 = vadd.f32 %v1095, %v1109
          %v1119 = vadd.f32 %v1096, %v1109
          %v1120 = vadd.f32 %v1097, %v1109
          %v1121 = vadd.f32 %v1098, %v1109
          %v1122 = vadd.f32 %v1099, %v1109
          %v1123 = vadd.f32 %v1100, %v1109
          %v1124 = vadd.f32 %v1101, %v1109
          %v1125 = vadd.f32 %v1102, %v1109
          %v1126 = vadd.f32 %v1103, %v1109
          %v1127 = vmax.f32 %v1111, 0.0
          %v1128 = vmax.f32 %v1112, 0.0
          %v1129 = vmax.f32 %v1113, 0.0
          %v1130 = vmax.f32 %v1114, 0.0
          %v1131 = vmax.f32 %v1115, 0.0
          %v1132 = vmax.f32 %v1116, 0.0
          %v1133 = vmax.f32 %v1117, 0.0
          %v1134 = vmax.f32 %v1118, 0.0
          %v1135 = vmax.f32 %v1119, 0.0
          %v1136 = vmax.f32 %v1120, 0.0
          %v1137 = vmax.f32 %v1121, 0.0
          %v1138 = vmax.f32 %v1122, 0.0
          %v1139 = vmax.f32 %v1123, 0.0
          %v1140 = vmax.f32 %v1124, 0.0
          %v1141 = vmax.f32 %v1125, 0.0
          %v1142 = vmax.f32 %v1126, 0.0
          %v1143 = vpack.c.bf16 %v1128, %v1127
          %v1144 = vpack.c.bf16 %v1130, %v1129
          %v1145 = vpack.c.bf16 %v1132, %v1131
          %v1146 = vpack.c.bf16 %v1134, %v1133
          %v1147 = vpack.c.bf16 %v1136, %v1135
          %v1148 = vpack.c.bf16 %v1138, %v1137
          %v1149 = vpack.c.bf16 %v1140, %v1139
          %v1150 = vpack.c.bf16 %v1142, %v1141
          %v1151 = vld [vmem:[%s4] sm:$0xf]
          %v1152 = vld [vmem:[%s4 + $0x4] sm:$0xf]
          %v1153 = vld [vmem:[%s4 + $0x8] sm:$0xf]
          %v1154 = vld [vmem:[%s4 + $0xc] sm:$0xf]
          %v1155 = vld [vmem:[%s5] sm:$0x1]
          %v1157 = vlaneseq
          %v1158 = vshrl.u32 %v1157, 7
          %v1159 = vsub.s32 0, %v1158
          %v1160 = vrot.slane %v1155, %v1159
          %v1166 = vunpack.c.l.b16 %v1151
          %v1167 = vunpack.c.l.b16 %v1152
          %v1168 = vunpack.c.l.b16 %v1153
          %v1169 = vunpack.c.l.b16 %v1154
          %v1170 = vpack.c.b16 %v1167, %v1166
          %v1171 = vpack.c.b16 %v1169, %v1168
          %v1175 = vsel %vm874, %v1143, 0
          %v1178 = vsel %vm874, %v1144, 0
          %v1181 = vsel %vm874, %v1145, 0
          %v1184 = vsel %vm874, %v1146, 0
          %v1187 = vsel %vm874, %v1147, 0
          %v1190 = vsel %vm874, %v1148, 0
          %v1193 = vsel %vm874, %v1149, 0
          %v1196 = vsel %vm874, %v1150, 0
          %1198 = vmatprep.subr.bf16.mxu0 0
          %1199 = vmatpush1.bf16.msra.mxu0 0
          %1200 = vmatprep.subr.bf16.mxu0 0
          %1201 = vmatpush1.bf16.msra.mxu0 0
          %1202 = vmatprep.subr.bf16.mxu0 0
          %1203 = vmatpush1.bf16.msra.mxu0 0
          %1204 = vmatprep.subr.bf16.mxu0 0
          %1205 = vmatpush1.bf16.msra.mxu0 0
          %1206 = vmatprep.subr.bf16.mxu0 0
          %1207 = vmatpush1.bf16.msra.mxu0 0
          %1208 = vmatprep.subr.bf16.mxu0 0
          %1209 = vmatpush1.bf16.msra.mxu0 0
          %1210 = vmatprep.subr.bf16.mxu0 0
          %1211 = vmatpush1.bf16.msra.mxu0 %v1171
          %1212 = vmatprep.subr.bf16.mxu0 0
          %1213 = vmatpush1.bf16.msra.mxu0 %v1170
          %1214 = vmatprep.subr.bf16.mxu0 0
          %1215 = vmatpush2.bf16.msra.mxu0 0
          %1216 = vmatprep.subr.bf16.mxu0 0
          %1217 = vmatpush2.bf16.msra.mxu0 0
          %1218 = vmatprep.subr.bf16.mxu0 0
          %1219 = vmatpush2.bf16.msra.mxu0 0
          %1220 = vmatprep.subr.bf16.mxu0 0
          %1221 = vmatpush2.bf16.msra.mxu0 0
          %1222 = vmatprep.subr.bf16.mxu0 0
          %1223 = vmatpush2.bf16.msra.mxu0 0
          %1224 = vmatprep.subr.bf16.mxu0 0
          %1225 = vmatpush2.bf16.msra.mxu0 0
          %1226 = vmatprep.subr.bf16.mxu0 0
          %1227 = vmatpush2.bf16.msra.mxu0 0
          %1228 = vmatprep.subr.bf16.mxu0 0
          %1229 = vmatpush2.bf16.msra.mxu0 0
          %1230 = vmatprep.mubr.bf16.mxu0 0
          %1231 = vmatmul.mubr.bf16.gmra.mxu0 %v1175
          %v1232 = vpop.f32.mrf.mxu0
          %v1233 = vadd.f32 %v1160, %v1232
          %v1234 = vpop.f32.mrf.mxu0
          %v1235 = vpop.f32.mrf.mxu0
          %v1236 = vadd.f32 %v1160, %v1235
          %v1237 = vpop.f32.mrf.mxu0
          %1238 = vmatprep.mubr.bf16.mxu0 0
          %1239 = vmatmul.mubr.bf16.gmra.mxu0 %v1178
          %v1240 = vpop.f32.mrf.mxu0
          %v1241 = vadd.f32 %v1160, %v1240
          %v1242 = vpop.f32.mrf.mxu0
          %v1243 = vpop.f32.mrf.mxu0
          %v1244 = vadd.f32 %v1160, %v1243
          %v1245 = vpop.f32.mrf.mxu0
          %1246 = vmatprep.mubr.bf16.mxu0 0
          %1247 = vmatmul.mubr.bf16.gmra.mxu0 %v1181
          %v1248 = vpop.f32.mrf.mxu0
          %v1249 = vadd.f32 %v1160, %v1248
          %v1250 = vpop.f32.mrf.mxu0
          %v1251 = vpop.f32.mrf.mxu0
          %v1252 = vadd.f32 %v1160, %v1251
          %v1253 = vpop.f32.mrf.mxu0
          %1254 = vmatprep.mubr.bf16.mxu0 0
          %1255 = vmatmul.mubr.bf16.gmra.mxu0 %v1184
          %v1256 = vpop.f32.mrf.mxu0
          %v1257 = vadd.f32 %v1160, %v1256
          %v1258 = vpop.f32.mrf.mxu0
          %v1259 = vpop.f32.mrf.mxu0
          %v1260 = vadd.f32 %v1160, %v1259
          %v1261 = vpop.f32.mrf.mxu0
          %1262 = vmatprep.mubr.bf16.mxu0 0
          %1263 = vmatmul.mubr.bf16.gmra.mxu0 %v1187
          %v1264 = vpop.f32.mrf.mxu0
          %v1265 = vadd.f32 %v1160, %v1264
          %v1266 = vpop.f32.mrf.mxu0
          %v1267 = vpop.f32.mrf.mxu0
          %v1268 = vadd.f32 %v1160, %v1267
          %v1269 = vpop.f32.mrf.mxu0
          %1270 = vmatprep.mubr.bf16.mxu0 0
          %1271 = vmatmul.mubr.bf16.gmra.mxu0 %v1190
          %v1272 = vpop.f32.mrf.mxu0
          %v1273 = vadd.f32 %v1160, %v1272
          %v1274 = vpop.f32.mrf.mxu0
          %v1275 = vpop.f32.mrf.mxu0
          %v1276 = vadd.f32 %v1160, %v1275
          %v1277 = vpop.f32.mrf.mxu0
          %1278 = vmatprep.mubr.bf16.mxu0 0
          %1279 = vmatmul.mubr.bf16.gmra.mxu0 %v1193
          %v1280 = vpop.f32.mrf.mxu0
          %v1281 = vadd.f32 %v1160, %v1280
          %v1282 = vpop.f32.mrf.mxu0
          %v1283 = vpop.f32.mrf.mxu0
          %v1284 = vadd.f32 %v1160, %v1283
          %v1285 = vpop.f32.mrf.mxu0
          %1286 = vmatprep.mubr.bf16.mxu0 0
          %1287 = vmatmul.mubr.bf16.gmra.mxu0 %v1196
          %v1288 = vpop.f32.mrf.mxu0
          %v1289 = vadd.f32 %v1160, %v1288
          %v1290 = vpop.f32.mrf.mxu0
          %v1291 = vpop.f32.mrf.mxu0
          %v1292 = vadd.f32 %v1160, %v1291
          %v1293 = vpop.f32.mrf.mxu0
          %1294 = vdwg.mxu0
          %v1295 = vpack.c.bf16 %v1236, %v1233
          %v1296 = vpack.c.bf16 %v1244, %v1241
          %v1297 = vpack.c.bf16 %v1252, %v1249
          %v1298 = vpack.c.bf16 %v1260, %v1257
          %v1299 = vpack.c.bf16 %v1268, %v1265
          %v1300 = vpack.c.bf16 %v1276, %v1273
          %v1301 = vpack.c.bf16 %v1284, %v1281
          %v1302 = vpack.c.bf16 %v1292, %v1289
          %v1303 = vld [vmem:[#allocation3] sm:$0xff]
          %v1304 = vld [vmem:[#allocation3 + $0x8] sm:$0xff]
          %v1305 = vld [vmem:[#allocation3 + $0x10] sm:$0xff]
          %v1306 = vld [vmem:[#allocation3 + $0x18] sm:$0xff]
          %v1307 = vld [vmem:[#allocation3 + $0x20] sm:$0xff]
          %v1308 = vld [vmem:[#allocation3 + $0x28] sm:$0xff]
          %v1309 = vld [vmem:[#allocation3 + $0x30] sm:$0xff]
          %v1310 = vld [vmem:[#allocation3 + $0x38] sm:$0xff]
          %v1311 = vld [vmem:[#allocation3 + $0x40] sm:$0xff]
          %v1312 = vld [vmem:[#allocation3 + $0x48] sm:$0xff]
          %v1313 = vld [vmem:[#allocation3 + $0x50] sm:$0xff]
          %v1314 = vld [vmem:[#allocation3 + $0x58] sm:$0xff]
          %v1315 = vld [vmem:[#allocation3 + $0x60] sm:$0xff]
          %v1316 = vld [vmem:[#allocation3 + $0x68] sm:$0xff]
          %v1317 = vld [vmem:[#allocation3 + $0x70] sm:$0xff]
          %v1318 = vld [vmem:[#allocation3 + $0x78] sm:$0xff]
          %v1319 = vadd.f32 %v1303, %v1109
          %v1320 = vadd.f32 %v1304, %v1109
          %v1321 = vadd.f32 %v1305, %v1109
          %v1322 = vadd.f32 %v1306, %v1109
          %v1323 = vadd.f32 %v1307, %v1109
          %v1324 = vadd.f32 %v1308, %v1109
          %v1325 = vadd.f32 %v1309, %v1109
          %v1326 = vadd.f32 %v1310, %v1109
          %v1327 = vadd.f32 %v1311, %v1109
          %v1328 = vadd.f32 %v1312, %v1109
          %v1329 = vadd.f32 %v1313, %v1109
          %v1330 = vadd.f32 %v1314, %v1109
          %v1331 = vadd.f32 %v1315, %v1109
          %v1332 = vadd.f32 %v1316, %v1109
          %v1333 = vadd.f32 %v1317, %v1109
          %v1334 = vadd.f32 %v1318, %v1109
          %v1335 = vmax.f32 %v1319, 0.0
          %v1336 = vmax.f32 %v1320, 0.0
          %v1337 = vmax.f32 %v1321, 0.0
          %v1338 = vmax.f32 %v1322, 0.0
          %v1339 = vmax.f32 %v1323, 0.0
          %v1340 = vmax.f32 %v1324, 0.0
          %v1341 = vmax.f32 %v1325, 0.0
          %v1342 = vmax.f32 %v1326, 0.0
          %v1343 = vmax.f32 %v1327, 0.0
          %v1344 = vmax.f32 %v1328, 0.0
          %v1345 = vmax.f32 %v1329, 0.0
          %v1346 = vmax.f32 %v1330, 0.0
          %v1347 = vmax.f32 %v1331, 0.0
          %v1348 = vmax.f32 %v1332, 0.0
          %v1349 = vmax.f32 %v1333, 0.0
          %v1350 = vmax.f32 %v1334, 0.0
          %v1351 = vpack.c.bf16 %v1336, %v1335
          %v1352 = vpack.c.bf16 %v1338, %v1337
          %v1353 = vpack.c.bf16 %v1340, %v1339
          %v1354 = vpack.c.bf16 %v1342, %v1341
          %v1355 = vpack.c.bf16 %v1344, %v1343
          %v1356 = vpack.c.bf16 %v1346, %v1345
          %v1357 = vpack.c.bf16 %v1348, %v1347
          %v1358 = vpack.c.bf16 %v1350, %v1349
          %v1360 = vsel %vm874, %v1351, 0
          %v1363 = vsel %vm874, %v1352, 0
          %v1366 = vsel %vm874, %v1353, 0
          %v1369 = vsel %vm874, %v1354, 0
          %v1372 = vsel %vm874, %v1355, 0
          %v1375 = vsel %vm874, %v1356, 0
          %v1378 = vsel %vm874, %v1357, 0
          %v1381 = vsel %vm874, %v1358, 0
          %1383 = vmatprep.subr.bf16.mxu0 0
          %1384 = vmatpush1.bf16.msra.mxu0 0
          %1385 = vmatprep.subr.bf16.mxu0 0
          %1386 = vmatpush1.bf16.msra.mxu0 0
          %1387 = vmatprep.subr.bf16.mxu0 0
          %1388 = vmatpush1.bf16.msra.mxu0 0
          %1389 = vmatprep.subr.bf16.mxu0 0
          %1390 = vmatpush1.bf16.msra.mxu0 0
          %1391 = vmatprep.subr.bf16.mxu0 0
          %1392 = vmatpush1.bf16.msra.mxu0 0
          %1393 = vmatprep.subr.bf16.mxu0 0
          %1394 = vmatpush1.bf16.msra.mxu0 0
          %1395 = vmatprep.subr.bf16.mxu0 0
          %1396 = vmatpush1.bf16.msra.mxu0 %v1171
          %1397 = vmatprep.subr.bf16.mxu0 0
          %1398 = vmatpush1.bf16.msra.mxu0 %v1170
          %1399 = vmatprep.subr.bf16.mxu0 0
          %1400 = vmatpush2.bf16.msra.mxu0 0
          %1401 = vmatprep.subr.bf16.mxu0 0
          %1402 = vmatpush2.bf16.msra.mxu0 0
          %1403 = vmatprep.subr.bf16.mxu0 0
          %1404 = vmatpush2.bf16.msra.mxu0 0
          %1405 = vmatprep.subr.bf16.mxu0 0
          %1406 = vmatpush2.bf16.msra.mxu0 0
          %1407 = vmatprep.subr.bf16.mxu0 0
          %1408 = vmatpush2.bf16.msra.mxu0 0
          %1409 = vmatprep.subr.bf16.mxu0 0
          %1410 = vmatpush2.bf16.msra.mxu0 0
          %1411 = vmatprep.subr.bf16.mxu0 0
          %1412 = vmatpush2.bf16.msra.mxu0 0
          %1413 = vmatprep.subr.bf16.mxu0 0
          %1414 = vmatpush2.bf16.msra.mxu0 0
          %1415 = vmatprep.mubr.bf16.mxu0 0
          %1416 = vmatmul.mubr.bf16.gmra.mxu0 %v1360
          %v1417 = vpop.f32.mrf.mxu0
          %v1418 = vadd.f32 %v1160, %v1417
          %v1419 = vpop.f32.mrf.mxu0
          %v1420 = vpop.f32.mrf.mxu0
          %v1421 = vadd.f32 %v1160, %v1420
          %v1422 = vpop.f32.mrf.mxu0
          %1423 = vmatprep.mubr.bf16.mxu0 0
          %1424 = vmatmul.mubr.bf16.gmra.mxu0 %v1363
          %v1425 = vpop.f32.mrf.mxu0
          %v1426 = vadd.f32 %v1160, %v1425
          %v1427 = vpop.f32.mrf.mxu0
          %v1428 = vpop.f32.mrf.mxu0
          %v1429 = vadd.f32 %v1160, %v1428
          %v1430 = vpop.f32.mrf.mxu0
          %1431 = vmatprep.mubr.bf16.mxu0 0
          %1432 = vmatmul.mubr.bf16.gmra.mxu0 %v1366
          %v1433 = vpop.f32.mrf.mxu0
          %v1434 = vadd.f32 %v1160, %v1433
          %v1435 = vpop.f32.mrf.mxu0
          %v1436 = vpop.f32.mrf.mxu0
          %v1437 = vadd.f32 %v1160, %v1436
          %v1438 = vpop.f32.mrf.mxu0
          %1439 = vmatprep.mubr.bf16.mxu0 0
          %1440 = vmatmul.mubr.bf16.gmra.mxu0 %v1369
          %v1441 = vpop.f32.mrf.mxu0
          %v1442 = vadd.f32 %v1160, %v1441
          %v1443 = vpop.f32.mrf.mxu0
          %v1444 = vpop.f32.mrf.mxu0
          %v1445 = vadd.f32 %v1160, %v1444
          %v1446 = vpop.f32.mrf.mxu0
          %1447 = vmatprep.mubr.bf16.mxu0 0
          %1448 = vmatmul.mubr.bf16.gmra.mxu0 %v1372
          %v1449 = vpop.f32.mrf.mxu0
          %v1450 = vadd.f32 %v1160, %v1449
          %v1451 = vpop.f32.mrf.mxu0
          %v1452 = vpop.f32.mrf.mxu0
          %v1453 = vadd.f32 %v1160, %v1452
          %v1454 = vpop.f32.mrf.mxu0
          %1455 = vmatprep.mubr.bf16.mxu0 0
          %1456 = vmatmul.mubr.bf16.gmra.mxu0 %v1375
          %v1457 = vpop.f32.mrf.mxu0
          %v1458 = vadd.f32 %v1160, %v1457
          %v1459 = vpop.f32.mrf.mxu0
          %v1460 = vpop.f32.mrf.mxu0
          %v1461 = vadd.f32 %v1160, %v1460
          %v1462 = vpop.f32.mrf.mxu0
          %1463 = vmatprep.mubr.bf16.mxu0 0
          %1464 = vmatmul.mubr.bf16.gmra.mxu0 %v1378
          %v1465 = vpop.f32.mrf.mxu0
          %v1466 = vadd.f32 %v1160, %v1465
          %v1467 = vpop.f32.mrf.mxu0
          %v1468 = vpop.f32.mrf.mxu0
          %v1469 = vadd.f32 %v1160, %v1468
          %v1470 = vpop.f32.mrf.mxu0
          %1471 = vmatprep.mubr.bf16.mxu0 0
          %1472 = vmatmul.mubr.bf16.gmra.mxu0 %v1381
          %v1473 = vpop.f32.mrf.mxu0
          %v1474 = vadd.f32 %v1160, %v1473
          %v1475 = vpop.f32.mrf.mxu0
          %v1476 = vpop.f32.mrf.mxu0
          %v1477 = vadd.f32 %v1160, %v1476
          %v1478 = vpop.f32.mrf.mxu0
          %1479 = vdwg.mxu0
          %v1480 = vpack.c.bf16 %v1421, %v1418
          %v1481 = vpack.c.bf16 %v1429, %v1426
          %v1482 = vpack.c.bf16 %v1437, %v1434
          %v1483 = vpack.c.bf16 %v1445, %v1442
          %v1484 = vpack.c.bf16 %v1453, %v1450
          %v1485 = vpack.c.bf16 %v1461, %v1458
          %v1486 = vpack.c.bf16 %v1469, %v1466
          %v1487 = vpack.c.bf16 %v1477, %v1474
          %v1488 = vld [vmem:[%s6] sm:$0xf]
          %v1489 = vld [vmem:[%s6 + $0x4] sm:$0xf]
          %v1490 = vld [vmem:[%s7] sm:$0xf]
          %v1491 = vld [vmem:[%s7 + $0x4] sm:$0xf]
          %v1494 = vunpack.c.l.b16 %v1490
          %v1495 = vunpack.c.l.b16 %v1491
          %v1496 = vpack.c.b16 %v1495, %v1494
          %vm1498 = vcmask 130048
          %v1500 = vsel %vm1498, %v1480, 0
          %v1503 = vsel %vm1498, %v1481, 0
          %v1506 = vsel %vm1498, %v1482, 0
          %v1509 = vsel %vm1498, %v1483, 0
          %v1512 = vsel %vm1498, %v1484, 0
          %v1515 = vsel %vm1498, %v1485, 0
          %v1518 = vsel %vm1498, %v1486, 0
          %v1521 = vsel %vm1498, %v1487, 0
          %1523 = vmatprep.subr.bf16.mxu0 0
          %1524 = vmatpush1.bf16.msra.mxu0 0
          %1525 = vmatprep.subr.bf16.mxu0 0
          %1526 = vmatpush1.bf16.msra.mxu0 0
          %1527 = vmatprep.subr.bf16.mxu0 0
          %1528 = vmatpush1.bf16.msra.mxu0 0
          %1529 = vmatprep.subr.bf16.mxu0 0
          %1530 = vmatpush1.bf16.msra.mxu0 0
          %1531 = vmatprep.subr.bf16.mxu0 0
          %1532 = vmatpush1.bf16.msra.mxu0 0
          %1533 = vmatprep.subr.bf16.mxu0 0
          %1534 = vmatpush1.bf16.msra.mxu0 0
          %1535 = vmatprep.subr.bf16.mxu0 0
          %1536 = vmatpush1.bf16.msra.mxu0 0
          %1537 = vmatprep.subr.bf16.mxu0 0
          %1538 = vmatpush1.bf16.msra.mxu0 %v1496
          %1539 = vmatprep.subr.bf16.mxu0 0
          %1540 = vmatpush2.bf16.msra.mxu0 0
          %1541 = vmatprep.subr.bf16.mxu0 0
          %1542 = vmatpush2.bf16.msra.mxu0 0
          %1543 = vmatprep.subr.bf16.mxu0 0
          %1544 = vmatpush2.bf16.msra.mxu0 0
          %1545 = vmatprep.subr.bf16.mxu0 0
          %1546 = vmatpush2.bf16.msra.mxu0 0
          %1547 = vmatprep.subr.bf16.mxu0 0
          %1548 = vmatpush2.bf16.msra.mxu0 0
          %1549 = vmatprep.subr.bf16.mxu0 0
          %1550 = vmatpush2.bf16.msra.mxu0 0
          %1551 = vmatprep.subr.bf16.mxu0 0
          %1552 = vmatpush2.bf16.msra.mxu0 0
          %1553 = vmatprep.subr.bf16.mxu0 0
          %1554 = vmatpush2.bf16.msra.mxu0 0
          %1555 = vmatprep.mubr.bf16.mxu0 0
          %1556 = vmatmul.mubr.bf16.gmra.mxu0 %v1500
          %v1557 = vpop.f32.mrf.mxu0
          %v1558 = vadd.f32 0.0, %v1557
          %v1559 = vpop.f32.mrf.mxu0
          %v1560 = vpop.f32.mrf.mxu0
          %v1561 = vadd.f32 0.0, %v1560
          %v1562 = vpop.f32.mrf.mxu0
          %1563 = vmatprep.mubr.bf16.mxu0 0
          %1564 = vmatmul.mubr.bf16.gmra.mxu0 %v1503
          %v1565 = vpop.f32.mrf.mxu0
          %v1566 = vadd.f32 0.0, %v1565
          %v1567 = vpop.f32.mrf.mxu0
          %v1568 = vpop.f32.mrf.mxu0
          %v1569 = vadd.f32 0.0, %v1568
          %v1570 = vpop.f32.mrf.mxu0
          %1571 = vmatprep.mubr.bf16.mxu0 0
          %1572 = vmatmul.mubr.bf16.gmra.mxu0 %v1506
          %v1573 = vpop.f32.mrf.mxu0
          %v1574 = vadd.f32 0.0, %v1573
          %v1575 = vpop.f32.mrf.mxu0
          %v1576 = vpop.f32.mrf.mxu0
          %v1577 = vadd.f32 0.0, %v1576
          %v1578 = vpop.f32.mrf.mxu0
          %1579 = vmatprep.mubr.bf16.mxu0 0
          %1580 = vmatmul.mubr.bf16.gmra.mxu0 %v1509
          %v1581 = vpop.f32.mrf.mxu0
          %v1582 = vadd.f32 0.0, %v1581
          %v1583 = vpop.f32.mrf.mxu0
          %v1584 = vpop.f32.mrf.mxu0
          %v1585 = vadd.f32 0.0, %v1584
          %v1586 = vpop.f32.mrf.mxu0
          %1587 = vmatprep.mubr.bf16.mxu0 0
          %1588 = vmatmul.mubr.bf16.gmra.mxu0 %v1512
          %v1589 = vpop.f32.mrf.mxu0
          %v1590 = vadd.f32 0.0, %v1589
          %v1591 = vpop.f32.mrf.mxu0
          %v1592 = vpop.f32.mrf.mxu0
          %v1593 = vadd.f32 0.0, %v1592
          %v1594 = vpop.f32.mrf.mxu0
          %1595 = vmatprep.mubr.bf16.mxu0 0
          %1596 = vmatmul.mubr.bf16.gmra.mxu0 %v1515
          %v1597 = vpop.f32.mrf.mxu0
          %v1598 = vadd.f32 0.0, %v1597
          %v1599 = vpop.f32.mrf.mxu0
          %v1600 = vpop.f32.mrf.mxu0
          %v1601 = vadd.f32 0.0, %v1600
          %v1602 = vpop.f32.mrf.mxu0
          %1603 = vmatprep.mubr.bf16.mxu0 0
          %1604 = vmatmul.mubr.bf16.gmra.mxu0 %v1518
          %v1605 = vpop.f32.mrf.mxu0
          %v1606 = vadd.f32 0.0, %v1605
          %v1607 = vpop.f32.mrf.mxu0
          %v1608 = vpop.f32.mrf.mxu0
          %v1609 = vadd.f32 0.0, %v1608
          %v1610 = vpop.f32.mrf.mxu0
          %1611 = vmatprep.mubr.bf16.mxu0 0
          %1612 = vmatmul.mubr.bf16.gmra.mxu0 %v1521
          %v1613 = vpop.f32.mrf.mxu0
          %v1614 = vadd.f32 0.0, %v1613
          %v1615 = vpop.f32.mrf.mxu0
          %v1616 = vpop.f32.mrf.mxu0
          %v1617 = vadd.f32 0.0, %v1616
          %v1618 = vpop.f32.mrf.mxu0
          %1619 = vdwg.mxu0
          %v1622 = vunpack.c.l.b16 %v1488
          %v1623 = vunpack.c.l.b16 %v1489
          %v1624 = vpack.c.b16 %v1623, %v1622
          %v1627 = vsel %vm1498, %v1295, 0
          %v1630 = vsel %vm1498, %v1296, 0
          %v1633 = vsel %vm1498, %v1297, 0
          %v1636 = vsel %vm1498, %v1298, 0
          %v1639 = vsel %vm1498, %v1299, 0
          %v1642 = vsel %vm1498, %v1300, 0
          %v1645 = vsel %vm1498, %v1301, 0
          %v1648 = vsel %vm1498, %v1302, 0
          %1650 = vmatprep.subr.bf16.mxu0 0
          %1651 = vmatpush1.bf16.msra.mxu0 0
          %1652 = vmatprep.subr.bf16.mxu0 0
          %1653 = vmatpush1.bf16.msra.mxu0 0
          %1654 = vmatprep.subr.bf16.mxu0 0
          %1655 = vmatpush1.bf16.msra.mxu0 0
          %1656 = vmatprep.subr.bf16.mxu0 0
          %1657 = vmatpush1.bf16.msra.mxu0 0
          %1658 = vmatprep.subr.bf16.mxu0 0
          %1659 = vmatpush1.bf16.msra.mxu0 0
          %1660 = vmatprep.subr.bf16.mxu0 0
          %1661 = vmatpush1.bf16.msra.mxu0 0
          %1662 = vmatprep.subr.bf16.mxu0 0
          %1663 = vmatpush1.bf16.msra.mxu0 0
          %1664 = vmatprep.subr.bf16.mxu0 0
          %1665 = vmatpush1.bf16.msra.mxu0 %v1624
          %1666 = vmatprep.subr.bf16.mxu0 0
          %1667 = vmatpush2.bf16.msra.mxu0 0
          %1668 = vmatprep.subr.bf16.mxu0 0
          %1669 = vmatpush2.bf16.msra.mxu0 0
          %1670 = vmatprep.subr.bf16.mxu0 0
          %1671 = vmatpush2.bf16.msra.mxu0 0
          %1672 = vmatprep.subr.bf16.mxu0 0
          %1673 = vmatpush2.bf16.msra.mxu0 0
          %1674 = vmatprep.subr.bf16.mxu0 0
          %1675 = vmatpush2.bf16.msra.mxu0 0
          %1676 = vmatprep.subr.bf16.mxu0 0
          %1677 = vmatpush2.bf16.msra.mxu0 0
          %1678 = vmatprep.subr.bf16.mxu0 0
          %1679 = vmatpush2.bf16.msra.mxu0 0
          %1680 = vmatprep.subr.bf16.mxu0 0
          %1681 = vmatpush2.bf16.msra.mxu0 0
          %1682 = vmatprep.mubr.bf16.mxu0 0
          %1683 = vmatmul.mubr.bf16.gmra.mxu0 %v1627
          %v1684 = vpop.f32.mrf.mxu0
          %v1685 = vadd.f32 %v1558, %v1684
          %v1686 = vpop.f32.mrf.mxu0
          %v1687 = vpop.f32.mrf.mxu0
          %v1688 = vadd.f32 %v1561, %v1687
          %v1689 = vpop.f32.mrf.mxu0
          %1690 = vmatprep.mubr.bf16.mxu0 0
          %1691 = vmatmul.mubr.bf16.gmra.mxu0 %v1630
          %v1692 = vpop.f32.mrf.mxu0
          %v1693 = vadd.f32 %v1566, %v1692
          %v1694 = vpop.f32.mrf.mxu0
          %v1695 = vpop.f32.mrf.mxu0
          %v1696 = vadd.f32 %v1569, %v1695
          %v1697 = vpop.f32.mrf.mxu0
          %1698 = vmatprep.mubr.bf16.mxu0 0
          %1699 = vmatmul.mubr.bf16.gmra.mxu0 %v1633
          %v1700 = vpop.f32.mrf.mxu0
          %v1701 = vadd.f32 %v1574, %v1700
          %v1702 = vpop.f32.mrf.mxu0
          %v1703 = vpop.f32.mrf.mxu0
          %v1704 = vadd.f32 %v1577, %v1703
          %v1705 = vpop.f32.mrf.mxu0
          %1706 = vmatprep.mubr.bf16.mxu0 0
          %1707 = vmatmul.mubr.bf16.gmra.mxu0 %v1636
          %v1708 = vpop.f32.mrf.mxu0
          %v1709 = vadd.f32 %v1582, %v1708
          %v1710 = vpop.f32.mrf.mxu0
          %v1711 = vpop.f32.mrf.mxu0
          %v1712 = vadd.f32 %v1585, %v1711
          %v1713 = vpop.f32.mrf.mxu0
          %1714 = vmatprep.mubr.bf16.mxu0 0
          %1715 = vmatmul.mubr.bf16.gmra.mxu0 %v1639
          %v1716 = vpop.f32.mrf.mxu0
          %v1717 = vadd.f32 %v1590, %v1716
          %v1718 = vpop.f32.mrf.mxu0
          %v1719 = vpop.f32.mrf.mxu0
          %v1720 = vadd.f32 %v1593, %v1719
          %v1721 = vpop.f32.mrf.mxu0
          %1722 = vmatprep.mubr.bf16.mxu0 0
          %1723 = vmatmul.mubr.bf16.gmra.mxu0 %v1642
          %v1724 = vpop.f32.mrf.mxu0
          %v1725 = vadd.f32 %v1598, %v1724
          %v1726 = vpop.f32.mrf.mxu0
          %v1727 = vpop.f32.mrf.mxu0
          %v1728 = vadd.f32 %v1601, %v1727
          %v1729 = vpop.f32.mrf.mxu0
          %1730 = vmatprep.mubr.bf16.mxu0 0
          %1731 = vmatmul.mubr.bf16.gmra.mxu0 %v1645
          %v1732 = vpop.f32.mrf.mxu0
          %v1733 = vadd.f32 %v1606, %v1732
          %v1734 = vpop.f32.mrf.mxu0
          %v1735 = vpop.f32.mrf.mxu0
          %v1736 = vadd.f32 %v1609, %v1735
          %v1737 = vpop.f32.mrf.mxu0
          %1738 = vmatprep.mubr.bf16.mxu0 0
          %1739 = vmatmul.mubr.bf16.gmra.mxu0 %v1648
          %v1740 = vpop.f32.mrf.mxu0
          %v1741 = vadd.f32 %v1614, %v1740
          %v1742 = vpop.f32.mrf.mxu0
          %v1743 = vpop.f32.mrf.mxu0
          %v1744 = vadd.f32 %v1617, %v1743
          %v1745 = vpop.f32.mrf.mxu0
          %1746 = vdwg.mxu0
          %v1747 = vld [vmem:[%s8] sm:$0x1]
          %v1749 = vlaneseq
          %v1750 = vshrl.u32 %v1749, 7
          %v1751 = vsub.s32 0, %v1750
          %v1752 = vrot.slane %v1747, %v1751
          %v1754 = vadd.f32 %v1685, %v1752
          %v1755 = vadd.f32 %v1688, %v1752
          %v1756 = vadd.f32 %v1693, %v1752
          %v1757 = vadd.f32 %v1696, %v1752
          %v1758 = vadd.f32 %v1701, %v1752
          %v1759 = vadd.f32 %v1704, %v1752
          %v1760 = vadd.f32 %v1709, %v1752
          %v1761 = vadd.f32 %v1712, %v1752
          %v1762 = vadd.f32 %v1717, %v1752
          %v1763 = vadd.f32 %v1720, %v1752
          %v1764 = vadd.f32 %v1725, %v1752
          %v1765 = vadd.f32 %v1728, %v1752
          %v1766 = vadd.f32 %v1733, %v1752
          %v1767 = vadd.f32 %v1736, %v1752
          %v1768 = vadd.f32 %v1741, %v1752
          %v1769 = vadd.f32 %v1744, %v1752
          %v1770 = vmax.f32 %v1754, 0.0
          %v1771 = vmax.f32 %v1755, 0.0
          %v1772 = vmax.f32 %v1756, 0.0
          %v1773 = vmax.f32 %v1757, 0.0
          %v1774 = vmax.f32 %v1758, 0.0
          %v1775 = vmax.f32 %v1759, 0.0
          %v1776 = vmax.f32 %v1760, 0.0
          %v1777 = vmax.f32 %v1761, 0.0
          %v1778 = vmax.f32 %v1762, 0.0
          %v1779 = vmax.f32 %v1763, 0.0
          %v1780 = vmax.f32 %v1764, 0.0
          %v1781 = vmax.f32 %v1765, 0.0
          %v1782 = vmax.f32 %v1766, 0.0
          %v1783 = vmax.f32 %v1767, 0.0
          %v1784 = vmax.f32 %v1768, 0.0
          %v1785 = vmax.f32 %v1769, 0.0
          %v1786 = vpack.c.bf16 %v1771, %v1770
          %v1787 = vpack.c.bf16 %v1773, %v1772
          %v1788 = vpack.c.bf16 %v1775, %v1774
          %v1789 = vpack.c.bf16 %v1777, %v1776
          %v1790 = vpack.c.bf16 %v1779, %v1778
          %v1791 = vpack.c.bf16 %v1781, %v1780
          %v1792 = vpack.c.bf16 %v1783, %v1782
          %v1793 = vpack.c.bf16 %v1785, %v1784
          %v1794 = vld [vmem:[%s9] sm:$0xf]
          %v1795 = vld [vmem:[%s9 + $0x4] sm:$0xf]
          %v1796 = vld [vmem:[%s9 + $0x8] sm:$0xf]
          %v1797 = vld [vmem:[%s9 + $0xc] sm:$0xf]
          %v1798 = vld [vmem:[%s10] sm:$0x1]
          %v1800 = vlaneseq
          %v1801 = vshrl.u32 %v1800, 7
          %v1802 = vsub.s32 0, %v1801
          %v1803 = vrot.slane %v1798, %v1802
          %v1809 = vunpack.c.l.b16 %v1794
          %v1810 = vunpack.c.l.b16 %v1795
          %v1811 = vunpack.c.l.b16 %v1796
          %v1812 = vunpack.c.l.b16 %v1797
          %v1813 = vpack.c.b16 %v1810, %v1809
          %v1814 = vpack.c.b16 %v1812, %v1811
          %v1818 = vsel %vm874, %v1786, 0
          %v1821 = vsel %vm874, %v1787, 0
          %v1824 = vsel %vm874, %v1788, 0
          %v1827 = vsel %vm874, %v1789, 0
          %v1830 = vsel %vm874, %v1790, 0
          %v1833 = vsel %vm874, %v1791, 0
          %v1836 = vsel %vm874, %v1792, 0
          %v1839 = vsel %vm874, %v1793, 0
          %1841 = vmatprep.subr.bf16.mxu0 0
          %1842 = vmatpush1.bf16.msra.mxu0 0
          %1843 = vmatprep.subr.bf16.mxu0 0
          %1844 = vmatpush1.bf16.msra.mxu0 0
          %1845 = vmatprep.subr.bf16.mxu0 0
          %1846 = vmatpush1.bf16.msra.mxu0 0
          %1847 = vmatprep.subr.bf16.mxu0 0
          %1848 = vmatpush1.bf16.msra.mxu0 0
          %1849 = vmatprep.subr.bf16.mxu0 0
          %1850 = vmatpush1.bf16.msra.mxu0 0
          %1851 = vmatprep.subr.bf16.mxu0 0
          %1852 = vmatpush1.bf16.msra.mxu0 0
          %1853 = vmatprep.subr.bf16.mxu0 0
          %1854 = vmatpush1.bf16.msra.mxu0 %v1814
          %1855 = vmatprep.subr.bf16.mxu0 0
          %1856 = vmatpush1.bf16.msra.mxu0 %v1813
          %1857 = vmatprep.subr.bf16.mxu0 0
          %1858 = vmatpush2.bf16.msra.mxu0 0
          %1859 = vmatprep.subr.bf16.mxu0 0
          %1860 = vmatpush2.bf16.msra.mxu0 0
          %1861 = vmatprep.subr.bf16.mxu0 0
          %1862 = vmatpush2.bf16.msra.mxu0 0
          %1863 = vmatprep.subr.bf16.mxu0 0
          %1864 = vmatpush2.bf16.msra.mxu0 0
          %1865 = vmatprep.subr.bf16.mxu0 0
          %1866 = vmatpush2.bf16.msra.mxu0 0
          %1867 = vmatprep.subr.bf16.mxu0 0
          %1868 = vmatpush2.bf16.msra.mxu0 0
          %1869 = vmatprep.subr.bf16.mxu0 0
          %1870 = vmatpush2.bf16.msra.mxu0 0
          %1871 = vmatprep.subr.bf16.mxu0 0
          %1872 = vmatpush2.bf16.msra.mxu0 0
          %1873 = vmatprep.mubr.bf16.mxu0 0
          %1874 = vmatmul.mubr.bf16.gmra.mxu0 %v1818
          %v1875 = vpop.f32.mrf.mxu0
          %v1876 = vadd.f32 %v1803, %v1875
          %v1877 = vpop.f32.mrf.mxu0
          %v1878 = vpop.f32.mrf.mxu0
          %v1879 = vadd.f32 %v1803, %v1878
          %v1880 = vpop.f32.mrf.mxu0
          %1881 = vmatprep.mubr.bf16.mxu0 0
          %1882 = vmatmul.mubr.bf16.gmra.mxu0 %v1821
          %v1883 = vpop.f32.mrf.mxu0
          %v1884 = vadd.f32 %v1803, %v1883
          %v1885 = vpop.f32.mrf.mxu0
          %v1886 = vpop.f32.mrf.mxu0
          %v1887 = vadd.f32 %v1803, %v1886
          %v1888 = vpop.f32.mrf.mxu0
          %1889 = vmatprep.mubr.bf16.mxu0 0
          %1890 = vmatmul.mubr.bf16.gmra.mxu0 %v1824
          %v1891 = vpop.f32.mrf.mxu0
          %v1892 = vadd.f32 %v1803, %v1891
          %v1893 = vpop.f32.mrf.mxu0
          %v1894 = vpop.f32.mrf.mxu0
          %v1895 = vadd.f32 %v1803, %v1894
          %v1896 = vpop.f32.mrf.mxu0
          %1897 = vmatprep.mubr.bf16.mxu0 0
          %1898 = vmatmul.mubr.bf16.gmra.mxu0 %v1827
          %v1899 = vpop.f32.mrf.mxu0
          %v1900 = vadd.f32 %v1803, %v1899
          %v1901 = vpop.f32.mrf.mxu0
          %v1902 = vpop.f32.mrf.mxu0
          %v1903 = vadd.f32 %v1803, %v1902
          %v1904 = vpop.f32.mrf.mxu0
          %1905 = vmatprep.mubr.bf16.mxu0 0
          %1906 = vmatmul.mubr.bf16.gmra.mxu0 %v1830
          %v1907 = vpop.f32.mrf.mxu0
          %v1908 = vadd.f32 %v1803, %v1907
          %v1909 = vpop.f32.mrf.mxu0
          %v1910 = vpop.f32.mrf.mxu0
          %v1911 = vadd.f32 %v1803, %v1910
          %v1912 = vpop.f32.mrf.mxu0
          %1913 = vmatprep.mubr.bf16.mxu0 0
          %1914 = vmatmul.mubr.bf16.gmra.mxu0 %v1833
          %v1915 = vpop.f32.mrf.mxu0
          %v1916 = vadd.f32 %v1803, %v1915
          %v1917 = vpop.f32.mrf.mxu0
          %v1918 = vpop.f32.mrf.mxu0
          %v1919 = vadd.f32 %v1803, %v1918
          %v1920 = vpop.f32.mrf.mxu0
          %1921 = vmatprep.mubr.bf16.mxu0 0
          %1922 = vmatmul.mubr.bf16.gmra.mxu0 %v1836
          %v1923 = vpop.f32.mrf.mxu0
          %v1924 = vadd.f32 %v1803, %v1923
          %v1925 = vpop.f32.mrf.mxu0
          %v1926 = vpop.f32.mrf.mxu0
          %v1927 = vadd.f32 %v1803, %v1926
          %v1928 = vpop.f32.mrf.mxu0
          %1929 = vmatprep.mubr.bf16.mxu0 0
          %1930 = vmatmul.mubr.bf16.gmra.mxu0 %v1839
          %v1931 = vpop.f32.mrf.mxu0
          %v1932 = vadd.f32 %v1803, %v1931
          %v1933 = vpop.f32.mrf.mxu0
          %v1934 = vpop.f32.mrf.mxu0
          %v1935 = vadd.f32 %v1803, %v1934
          %v1936 = vpop.f32.mrf.mxu0
          %1937 = vdwg.mxu0
          %v1938 = vmax.f32 %v1876, 0.0
          %v1939 = vmax.f32 %v1879, 0.0
          %v1940 = vmax.f32 %v1884, 0.0
          %v1941 = vmax.f32 %v1887, 0.0
          %v1942 = vmax.f32 %v1892, 0.0
          %v1943 = vmax.f32 %v1895, 0.0
          %v1944 = vmax.f32 %v1900, 0.0
          %v1945 = vmax.f32 %v1903, 0.0
          %v1946 = vmax.f32 %v1908, 0.0
          %v1947 = vmax.f32 %v1911, 0.0
          %v1948 = vmax.f32 %v1916, 0.0
          %v1949 = vmax.f32 %v1919, 0.0
          %v1950 = vmax.f32 %v1924, 0.0
          %v1951 = vmax.f32 %v1927, 0.0
          %v1952 = vmax.f32 %v1932, 0.0
          %v1953 = vmax.f32 %v1935, 0.0
          %v1954 = vld [vmem:[%s11] sm:$0x1]
          %v1956 = vlaneseq
          %v1957 = vshrl.u32 %v1956, 7
          %v1958 = vsub.s32 0, %v1957
          %v1959 = vrot.slane %v1954, %v1958
          %v1961 = vmul.f32 %v1938, %v1959
          %v1962 = vmul.f32 %v1939, %v1959
          %v1963 = vmul.f32 %v1940, %v1959
          %v1964 = vmul.f32 %v1941, %v1959
          %v1965 = vmul.f32 %v1942, %v1959
          %v1966 = vmul.f32 %v1943, %v1959
          %v1967 = vmul.f32 %v1944, %v1959
          %v1968 = vmul.f32 %v1945, %v1959
          %v1969 = vmul.f32 %v1946, %v1959
          %v1970 = vmul.f32 %v1947, %v1959
          %v1971 = vmul.f32 %v1948, %v1959
          %v1972 = vmul.f32 %v1949, %v1959
          %v1973 = vmul.f32 %v1950, %v1959
          %v1974 = vmul.f32 %v1951, %v1959
          %v1975 = vmul.f32 %v1952, %v1959
          %v1976 = vmul.f32 %v1953, %v1959
          %v1977 = vsel %vm1498, %v1961, 0.0
          %1978 = vadd.xlane.f32.xlu0 %v1977
          %v1979 = vpop.xlane.xlu0 %1978
          %v1980 = vsel %vm1498, %v1962, 0.0
          %1981 = vadd.xlane.f32.xlu0 %v1980
          %v1982 = vpop.xlane.xlu0 %1981
          %v1983 = vsel %vm1498, %v1963, 0.0
          %1984 = vadd.xlane.f32.xlu0 %v1983
          %v1985 = vpop.xlane.xlu0 %1984
          %v1986 = vsel %vm1498, %v1964, 0.0
          %1987 = vadd.xlane.f32.xlu0 %v1986
          %v1988 = vpop.xlane.xlu0 %1987
          %v1989 = vsel %vm1498, %v1965, 0.0
          %1990 = vadd.xlane.f32.xlu0 %v1989
          %v1991 = vpop.xlane.xlu0 %1990
          %v1992 = vsel %vm1498, %v1966, 0.0
          %1993 = vadd.xlane.f32.xlu0 %v1992
          %v1994 = vpop.xlane.xlu0 %1993
          %v1995 = vsel %vm1498, %v1967, 0.0
          %1996 = vadd.xlane.f32.xlu0 %v1995
          %v1997 = vpop.xlane.xlu0 %1996
          %v1998 = vsel %vm1498, %v1968, 0.0
          %1999 = vadd.xlane.f32.xlu0 %v1998
          %v2000 = vpop.xlane.xlu0 %1999
          %v2001 = vsel %vm1498, %v1969, 0.0
          %2002 = vadd.xlane.f32.xlu0 %v2001
          %v2003 = vpop.xlane.xlu0 %2002
          %v2004 = vsel %vm1498, %v1970, 0.0
          %2005 = vadd.xlane.f32.xlu0 %v2004
          %v2006 = vpop.xlane.xlu0 %2005
          %v2007 = vsel %vm1498, %v1971, 0.0
          %2008 = vadd.xlane.f32.xlu0 %v2007
          %v2009 = vpop.xlane.xlu0 %2008
          %v2010 = vsel %vm1498, %v1972, 0.0
          %2011 = vadd.xlane.f32.xlu0 %v2010
          %v2012 = vpop.xlane.xlu0 %2011
          %v2013 = vsel %vm1498, %v1973, 0.0
          %2014 = vadd.xlane.f32.xlu0 %v2013
          %v2015 = vpop.xlane.xlu0 %2014
          %v2016 = vsel %vm1498, %v1974, 0.0
          %2017 = vadd.xlane.f32.xlu0 %v2016
          %v2018 = vpop.xlane.xlu0 %2017
          %v2019 = vsel %vm1498, %v1975, 0.0
          %2020 = vadd.xlane.f32.xlu0 %v2019
          %v2021 = vpop.xlane.xlu0 %2020
          %v2022 = vsel %vm1498, %v1976, 0.0
          %2023 = vadd.xlane.f32.xlu0 %v2022
          %v2024 = vpop.xlane.xlu0 %2023
          %v2025 = vld [vmem:[#allocation4] sm:$0x1]
          %2027 = vset.pattern.permute.xlu0 0
          %2028 = vperm.xlu0 %2027, %v2025
          %v2029 = vpop.permute.xlu0 %2028
          %v2031 = vlaneseq
          %v2032 = vshrl.u32 %v2031, 7
          %v2033 = vsub.s32 0, %v2032
          %v2034 = vrot.slane %v2029, %v2033
          %v2035 = vadd.f32 %v1979, %v2034
          %v2036 = vadd.f32 %v1982, %v2034
          %v2037 = vadd.f32 %v1985, %v2034
          %v2038 = vadd.f32 %v1988, %v2034
          %v2039 = vadd.f32 %v1991, %v2034
          %v2040 = vadd.f32 %v1994, %v2034
          %v2041 = vadd.f32 %v1997, %v2034
          %v2042 = vadd.f32 %v2000, %v2034
          %v2043 = vadd.f32 %v2003, %v2034
          %v2044 = vadd.f32 %v2006, %v2034
          %v2045 = vadd.f32 %v2009, %v2034
          %v2046 = vadd.f32 %v2012, %v2034
          %v2047 = vadd.f32 %v2015, %v2034
          %v2048 = vadd.f32 %v2018, %v2034
          %v2049 = vadd.f32 %v2021, %v2034
          %v2050 = vadd.f32 %v2024, %v2034
          %v2067 = vlaneseq
          %v2068 = vand.u32 %v2067, 127
          %v2069 = vlaneseq
          %v2070 = vshrl.u32 %v2069, 7
          %v2071 = vsub.s32 %v2068, %v2070
          %v2072 = vrot.slane %v2035, %v2071
          %v2073 = vadd.s32 %v2068, 4294967288
          %v2074 = vlaneseq
          %v2075 = vshrl.u32 %v2074, 7
          %v2076 = vsub.s32 %v2073, %v2075
          %v2077 = vrot.slane %v2036, %v2076
          %vm2078 = vcmask 130112
          %v2079 = vsel %vm2078, %v2077, %v2072
          %v2080 = vadd.s32 %v2068, 4294967280
          %v2081 = vlaneseq
          %v2082 = vshrl.u32 %v2081, 7
          %v2083 = vsub.s32 %v2080, %v2082
          %v2084 = vrot.slane %v2037, %v2083
          %vm2085 = vcmask 195712
          %v2086 = vsel %vm2085, %v2084, %v2079
          %v2087 = vadd.s32 %v2068, 4294967272
          %v2088 = vlaneseq
          %v2089 = vshrl.u32 %v2088, 7
          %v2090 = vsub.s32 %v2087, %v2089
          %v2091 = vrot.slane %v2038, %v2090
          %vm2092 = vcmask 261312
          %v2093 = vsel %vm2092, %v2091, %v2086
          %v2094 = vadd.s32 %v2068, 4294967264
          %v2095 = vlaneseq
          %v2096 = vshrl.u32 %v2095, 7
          %v2097 = vsub.s32 %v2094, %v2096
          %v2098 = vrot.slane %v2039, %v2097
          %vm2099 = vcmask 326912
          %v2100 = vsel %vm2099, %v2098, %v2093
          %v2101 = vadd.s32 %v2068, 4294967256
          %v2102 = vlaneseq
          %v2103 = vshrl.u32 %v2102, 7
          %v2104 = vsub.s32 %v2101, %v2103
          %v2105 = vrot.slane %v2040, %v2104
          %vm2106 = vcmask 392512
          %v2107 = vsel %vm2106, %v2105, %v2100
          %v2108 = vadd.s32 %v2068, 4294967248
          %v2109 = vlaneseq
          %v2110 = vshrl.u32 %v2109, 7
          %v2111 = vsub.s32 %v2108, %v2110
          %v2112 = vrot.slane %v2041, %v2111
          %vm2113 = vcmask 458112
          %v2114 = vsel %vm2113, %v2112, %v2107
          %v2115 = vadd.s32 %v2068, 4294967240
          %v2116 = vlaneseq
          %v2117 = vshrl.u32 %v2116, 7
          %v2118 = vsub.s32 %v2115, %v2117
          %v2119 = vrot.slane %v2042, %v2118
          %vm2120 = vcmask 523712
          %v2121 = vsel %vm2120, %v2119, %v2114
          %v2122 = vadd.s32 %v2068, 4294967232
          %v2123 = vlaneseq
          %v2124 = vshrl.u32 %v2123, 7
          %v2125 = vsub.s32 %v2122, %v2124
          %v2126 = vrot.slane %v2043, %v2125
          %vm2127 = vcmask 589312
          %v2128 = vsel %vm2127, %v2126, %v2121
          %v2129 = vadd.s32 %v2068, 4294967224
          %v2130 = vlaneseq
          %v2131 = vshrl.u32 %v2130, 7
          %v2132 = vsub.s32 %v2129, %v2131
          %v2133 = vrot.slane %v2044, %v2132
          %vm2134 = vcmask 654912
          %v2135 = vsel %vm2134, %v2133, %v2128
          %v2136 = vadd.s32 %v2068, 4294967216
          %v2137 = vlaneseq
          %v2138 = vshrl.u32 %v2137, 7
          %v2139 = vsub.s32 %v2136, %v2138
          %v2140 = vrot.slane %v2045, %v2139
          %vm2141 = vcmask 720512
          %v2142 = vsel %vm2141, %v2140, %v2135
          %v2143 = vadd.s32 %v2068, 4294967208
          %v2144 = vlaneseq
          %v2145 = vshrl.u32 %v2144, 7
          %v2146 = vsub.s32 %v2143, %v2145
          %v2147 = vrot.slane %v2046, %v2146
          %vm2148 = vcmask 786112
          %v2149 = vsel %vm2148, %v2147, %v2142
          %v2150 = vadd.s32 %v2068, 4294967200
          %v2151 = vlaneseq
          %v2152 = vshrl.u32 %v2151, 7
          %v2153 = vsub.s32 %v2150, %v2152
          %v2154 = vrot.slane %v2047, %v2153
          %vm2155 = vcmask 851712
          %v2156 = vsel %vm2155, %v2154, %v2149
          %v2157 = vadd.s32 %v2068, 4294967192
          %v2158 = vlaneseq
          %v2159 = vshrl.u32 %v2158, 7
          %v2160 = vsub.s32 %v2157, %v2159
          %v2161 = vrot.slane %v2048, %v2160
          %vm2162 = vcmask 917312
          %v2163 = vsel %vm2162, %v2161, %v2156
          %v2164 = vadd.s32 %v2068, 4294967184
          %v2165 = vlaneseq
          %v2166 = vshrl.u32 %v2165, 7
          %v2167 = vsub.s32 %v2164, %v2166
          %v2168 = vrot.slane %v2049, %v2167
          %vm2169 = vcmask 982912
          %v2170 = vsel %vm2169, %v2168, %v2163
          %v2171 = vadd.s32 %v2068, 4294967176
          %v2172 = vlaneseq
          %v2173 = vshrl.u32 %v2172, 7
          %v2174 = vsub.s32 %v2171, %v2173
          %v2175 = vrot.slane %v2050, %v2174
          %vm2176 = vcmask 1048512
          %v2177 = vsel %vm2176, %v2175, %v2170
          %2179 = vst [vmem:[%s521] sm:$0x1] %v2177
        $region88: #{tpu_custom_call.1} parent=71 // pred_fallthru
          _
        %s2180 = sand.u32 %s342, 1
        %s2181 = scalar_lea.sflag [#allocation7], %s2180
        %s2182 = sand.u32 %s342, 1
        %s2183 = scalar_lea.vmem [#allocation10], %s2182
        // Predicated region
        $region89: #{tpu_custom_call.1} parent=71 // pred_check
          %p2184 = pneg %p352
        $region90: #{tpu_custom_call.1} parent=71 // pred_check_branch
          %2186 = sbr.rel (%p2184) target = $region92
        $region91: #{tpu_custom_call.1} parent=71 // pred_region
          %s2188 = ssub.s32 16, 16
          %2189 = vsyncadd %s2181, %s2188
          %s2190 = smul.addr %s39, 16
          %s2191 = scalar_lea.hbm %s13, %s2190
          %s2193 = sshll.u32 %s2183, 4
          %s2194 = int_to_ptr.vmem [resolvable:$true] %s2193
          %2196 = dma.vmem_to_hbm [thread:$0]  %s2194, 16, %s2191, %s2181
        $region92: #{tpu_custom_call.1} parent=71 // pred_fallthru
          _
      $region72: #{tpu_custom_call.1} parent=5 // pred_fallthru
        _
      %p2197 = scmp.le.s32.totalorder 2, %s30
      // Predicated region
      $region93: #{tpu_custom_call.1} parent=5 // pred_check
        %p2198 = pneg %p2197
      $region94: #{tpu_custom_call.1} parent=5 // pred_check_branch
        %2200 = sbr.rel (%p2198) target = $region96
      $region95: #{tpu_custom_call.1} parent=5 // pred_region
        %s2201 = ssub.s32 %s30, 2
        // Predicated region
        $region97: #{tpu_custom_call.1} parent=95 // pred_check
          %p2202 = pneg %p358
        $region98: #{tpu_custom_call.1} parent=95 // pred_check_branch
          %2204 = sbr.rel (%p2202) target = $region100
        $region99: #{tpu_custom_call.1} parent=95 // pred_region
          %s2205 = sand.u32 %s343, 1
          %s2206 = scalar_lea.sflag [#allocation7], %s2205
          %s2207 = sand.u32 %s343, 1
          %s2208 = scalar_lea.vmem [#allocation10], %s2207
          %2209 = dma.done %s2206, 16
        $region100: #{tpu_custom_call.1} parent=95 // pred_fallthru
          _
      $region96: #{tpu_custom_call.1} parent=5 // pred_fallthru
        _
    $region6: #{tpu_custom_call.1} parent=1 // loop_footer
      %s34 = sadd.s32 1, %s30
    $region7: #{tpu_custom_call.1} parent=1 // loop_footer_branch
      %29 = sbr.rel target = $region3
    $region8: #{tpu_custom_call.1} parent=1 // loop_exit
      _
    %2210 = vsyncpa [#allocation6], 1
    %s2211 = scalar_lea.sflag [#allocation6], 1
    %2212 = vsyncpa %s2211, 1
    %2213 = vsyncpa [#allocation9], 1
    %s2214 = scalar_lea.sflag [#allocation9], 1
    %2215 = vsyncpa %s2214, 1
    %2216 = vsyncpa [#allocation7], 1
    %s2217 = scalar_lea.sflag [#allocation7], 1
    %2218 = vsyncpa %s2217, 1

</llo_original>
